<compile_context>
chip_gen: v7x
topology: tpu7x:2x2x1
jax: 0.10.0
libtpu: 0.0.40
codegen_flags: <defaults>
</compile_context>

<pallas_src>
import jax
import jax.numpy as jnp
from jax.experimental import pallas as pl
from jax.experimental.pallas import tpu as pltpu


def _twin_eval_kernel(thresh_ref, t_idx_ref, s_idx_ref, lab_ref, table_ref,
                      nfn_ref, nfp_ref):
    """One tile of pairs: signed one-hot MXU gather, squared distances, counts.

    thresh_ref : SMEM f32 [1]      threshold (mu * ratio)
    t_idx_ref  : VMEM i32 [TP, 1]  row index into concat table (xT rows)
    s_idx_ref  : VMEM i32 [TP, 1]  row index into concat table (xS rows, pre-offset)
    lab_ref    : VMEM i32 [TP, 1]  1 = positive pair, 2 = negative pair, 0 = padding
    table_ref  : VMEM f32 [K, Dp]  concat(xT, xS), zero-padded rows / lanes
    nfn_ref, nfp_ref : VMEM i32 [1, 1] accumulated counters
    """
    tile = pl.program_id(0)

    @pl.when(tile == 0)
    def _init():
        nfn_ref[...] = jnp.zeros_like(nfn_ref)
        nfp_ref[...] = jnp.zeros_like(nfp_ref)

    thresh = thresh_ref[0]

    tp = t_idx_ref.shape[0]
    k = table_ref.shape[0]

    t_col = t_idx_ref[...]          # [TP, 1]
    s_col = s_idx_ref[...]          # [TP, 1]
    lab = lab_ref[...]              # [TP, 1]

    # Signed one-hot: +1 at the xT row, -1 at the (offset) xS row.
    col = jax.lax.broadcasted_iota(jnp.int32, (tp, k), 1)
    onehot = ((col == t_col).astype(jnp.float32)
              - (col == s_col).astype(jnp.float32))        # [TP, K]

    # MXU gather-and-subtract: diff[i, :] = xT[t_idx[i]] - xS[s_idx[i]].
    diff = jnp.dot(onehot, table_ref[...],
                   preferred_element_type=jnp.float32,
                   precision=jax.lax.Precision.HIGHEST)    # [TP, Dp]

    norm2 = jnp.sum(diff * diff, axis=1, keepdims=True)    # [TP, 1] f32

    fn_mask = jnp.logical_and(lab == 1, norm2 > thresh)    # false negatives
    fp_mask = jnp.logical_and(lab == 2, norm2 < thresh)    # false positives

    nfn_ref[...] += jnp.sum(fn_mask.astype(jnp.int32), keepdims=True)
    nfp_ref[...] += jnp.sum(fp_mask.astype(jnp.int32), keepdims=True)


def twin_eval(xS, xT, p_, n_, mu=5, ratio=0.5, tile_pairs=128):
    xS = jnp.asarray(xS, jnp.float32)
    xT = jnp.asarray(xT, jnp.float32)
    p_ = jnp.asarray(p_, jnp.int32)
    n_ = jnp.asarray(n_, jnp.int32)

    n_t, d = xT.shape
    n_s, d_s = xS.shape
    assert d == d_s, "xS / xT feature dims must match"

    # Concatenated, zero-padded row table: [K_pad, D_pad], xT rows first.
    d_pad = pl.cdiv(d, 128) * 128
    k = n_t + n_s
    k_pad = pl.cdiv(k, 8) * 8
    table = jnp.zeros((k_pad, d_pad), jnp.float32)
    table = table.at[:n_t, :d].set(xT)
    table = table.at[n_t:k, :d].set(xS)

    # Concatenated, padded pair list. lab: 1 = positive, 2 = negative, 0 = pad.
    num_p = int(p_.shape[0])
    num_n = int(n_.shape[0])
    total = num_p + num_n
    num_tiles = max(1, pl.cdiv(total, tile_pairs))
    total_pad = num_tiles * tile_pairs

    t_idx = jnp.zeros((total_pad, 1), jnp.int32)
    s_idx = jnp.zeros((total_pad, 1), jnp.int32)
    lab = jnp.zeros((total_pad, 1), jnp.int32)
    t_idx = t_idx.at[:num_p, 0].set(p_[:, 0]).at[num_p:total, 0].set(n_[:, 0])
    s_idx = s_idx.at[:num_p, 0].set(p_[:, 1]).at[num_p:total, 0].set(n_[:, 1])
    s_idx = s_idx + n_t     # offset into the concatenated table (xS block)
    lab = lab.at[:num_p, 0].set(1).at[num_p:total, 0].set(2)

    thresh = jnp.full((1,), float(mu) * float(ratio), jnp.float32)

    nfn, nfp = pl.pallas_call(
        _twin_eval_kernel,
        out_shape=(
            jax.ShapeDtypeStruct((1, 1), jnp.int32),
            jax.ShapeDtypeStruct((1, 1), jnp.int32),
        ),
        grid=(num_tiles,),
        in_specs=[
            pl.BlockSpec(memory_space=pltpu.MemorySpace.SMEM),    # thresh
            pl.BlockSpec((tile_pairs, 1), lambda i: (i, 0)),      # t_idx
            pl.BlockSpec((tile_pairs, 1), lambda i: (i, 0)),      # s_idx
            pl.BlockSpec((tile_pairs, 1), lambda i: (i, 0)),      # lab
            pl.BlockSpec((k_pad, d_pad), lambda i: (0, 0)),       # table (resident)
        ],
        out_specs=(
            pl.BlockSpec((1, 1), lambda i: (0, 0)),
            pl.BlockSpec((1, 1), lambda i: (0, 0)),
        ),
        compiler_params=pltpu.CompilerParams(
            dimension_semantics=("arbitrary",),
        ),
    )(thresh, t_idx, s_idx, lab, table)

    return nfn[0, 0], nfp[0, 0]


def _reference(xS, xT, p_, n_, mu=5, ratio=0.5):
    thresh = mu * ratio
    pNorm2 = jnp.sum((xT[p_[:, 0], :] - xS[p_[:, 1], :]) ** 2, axis=1)
    nNorm2 = jnp.sum((xT[n_[:, 0], :] - xS[n_[:, 1], :]) ** 2, axis=1)
    nFN = jnp.sum(pNorm2 > thresh).astype(jnp.int32)
    nFP = jnp.sum(nNorm2 < thresh).astype(jnp.int32)
    return nFN, nFP


if __name__ == "__main__":
    key = jax.random.PRNGKey(0)
    kS, kT, kp, kn = jax.random.split(key, 4)

    num_rows = 16     # rows in each embedding table
    feat = 32         # feature / hidden dim
    num_pos = 8       # positive pairs
    num_neg = 8       # negative pairs

    # Scale so some squared distances fall on each side of thresh = 2.5.
    xS = jax.random.normal(kS, (num_rows, feat), dtype=jnp.float32) * 0.3
    xT = jax.random.normal(kT, (num_rows, feat), dtype=jnp.float32) * 0.3
    p_ = jax.random.randint(kp, (num_pos, 2), 0, num_rows, dtype=jnp.int32)
    n_ = jax.random.randint(kn, (num_neg, 2), 0, num_rows, dtype=jnp.int32)

    nfn, nfp = twin_eval(xS, xT, p_, n_)
    nfn = jax.block_until_ready(nfn)
    nfp = jax.block_until_ready(nfp)

    ref_nfn, ref_nfp = _reference(xS, xT, p_, n_)
    assert int(nfn) == int(ref_nfn), (int(nfn), int(ref_nfn))
    assert int(nfp) == int(ref_nfp), (int(nfp), int(ref_nfp))

    print("KERNEL_OK")
</pallas_src>

<mosaic_0001>
module attributes {stable_mosaic.version = 11 : i64} {
  func.func @_twin_eval_kernel(%arg0: i32, %arg1: memref<1xf32, #tpu.memory_space<smem>>, %arg2: memref<128x1xi32, #tpu.memory_space<vmem>>, %arg3: memref<128x1xi32, #tpu.memory_space<vmem>>, %arg4: memref<128x1xi32, #tpu.memory_space<vmem>>, %arg5: memref<32x128xf32, #tpu.memory_space<vmem>>, %arg6: memref<1x1xi32, #tpu.memory_space<vmem>>, %arg7: memref<1x1xi32, #tpu.memory_space<vmem>>) attributes {dimension_semantics = [#tpu.dimension_semantics<arbitrary>], iteration_bounds = array<i64: 1>, scalar_prefetch = 0 : i64, scratch_operands = 0 : i64, tpu.core_type = #tpu.core_type<tc>, window_params = [{transform_indices = @transform_0, window_bounds = array<i64: 1>}, {transform_indices = @transform_1, window_bounds = array<i64: 128, 1>}, {transform_indices = @transform_2, window_bounds = array<i64: 128, 1>}, {transform_indices = @transform_3, window_bounds = array<i64: 128, 1>}, {pipeline_mode = #tpu.pipeline_mode<synchronous>, transform_indices = @transform_4, window_bounds = array<i64: 32, 128>}, {pipeline_mode = #tpu.pipeline_mode<synchronous>, transform_indices = @transform_5, window_bounds = array<i64: 1, 1>}, {pipeline_mode = #tpu.pipeline_mode<synchronous>, transform_indices = @transform_6, window_bounds = array<i64: 1, 1>}]} {
    %c0_i32 = arith.constant 0 : i32
    %0 = arith.cmpi eq, %arg0, %c0_i32 : i32
    %1 = arith.extui %0 : i1 to i32
    %c0_i32_0 = arith.constant 0 : i32
    %2 = arith.cmpi ne, %1, %c0_i32_0 : i32
    scf.if %2 {
      %c0_i32_20 = arith.constant 0 : i32
      %50 = vector.broadcast %c0_i32_20 : i32 to vector<1x1xi32>
      %c0_21 = arith.constant 0 : index
      %c0_22 = arith.constant 0 : index
      %51 = vector.load %arg6[%c0_21, %c0_22] : memref<1x1xi32, #tpu.memory_space<vmem>>, vector<1x1xi32>
      tpu.vector_store %arg6[%c0_21, %c0_22], %50 {strides = array<i32>} : memref<1x1xi32, #tpu.memory_space<vmem>>, vector<1x1xi32>,
      %c0_i32_23 = arith.constant 0 : i32
      %52 = vector.broadcast %c0_i32_23 : i32 to vector<1x1xi32>
      %c0_24 = arith.constant 0 : index
      %c0_25 = arith.constant 0 : index
      %53 = vector.load %arg7[%c0_24, %c0_25] : memref<1x1xi32, #tpu.memory_space<vmem>>, vector<1x1xi32>
      tpu.vector_store %arg7[%c0_24, %c0_25], %52 {strides = array<i32>} : memref<1x1xi32, #tpu.memory_space<vmem>>, vector<1x1xi32>,
    } else {
    }
    %c0 = arith.constant 0 : index
    %3 = memref.load %arg1[%c0] : memref<1xf32, #tpu.memory_space<smem>>
    %c0_1 = arith.constant 0 : index
    %c0_2 = arith.constant 0 : index
    %4 = vector.load %arg2[%c0_1, %c0_2] : memref<128x1xi32, #tpu.memory_space<vmem>>, vector<128x1xi32>
    %c0_3 = arith.constant 0 : index
    %c0_4 = arith.constant 0 : index
    %5 = vector.load %arg3[%c0_3, %c0_4] : memref<128x1xi32, #tpu.memory_space<vmem>>, vector<128x1xi32>
    %c0_5 = arith.constant 0 : index
    %c0_6 = arith.constant 0 : index
    %6 = vector.load %arg4[%c0_5, %c0_6] : memref<128x1xi32, #tpu.memory_space<vmem>>, vector<128x1xi32>
    %7 = tpu.iota {dimensions = array<i32: 1>} : vector<128x32xi32>
    %8 = vector.broadcast %4 : vector<128x1xi32> to vector<128x32xi32>
    %9 = arith.cmpi eq, %7, %8 : vector<128x32xi32>
    %10 = arith.extui %9 : vector<128x32xi1> to vector<128x32xi32>
    %11 = arith.sitofp %10 : vector<128x32xi32> to vector<128x32xf32>
    %12 = vector.broadcast %5 : vector<128x1xi32> to vector<128x32xi32>
    %13 = arith.cmpi eq, %7, %12 : vector<128x32xi32>
    %14 = arith.extui %13 : vector<128x32xi1> to vector<128x32xi32>
    %15 = arith.sitofp %14 : vector<128x32xi32> to vector<128x32xf32>
    %16 = arith.subf %11, %15 : vector<128x32xf32>
    %c0_7 = arith.constant 0 : index
    %c0_8 = arith.constant 0 : index
    %17 = vector.load %arg5[%c0_7, %c0_8] : memref<32x128xf32, #tpu.memory_space<vmem>>, vector<32x128xf32>
    %cst = arith.constant dense<0.000000e+00> : vector<128x128xf32>
    %18 = tpu.matmul %16, %17, %cst {dimension_numbers = #tpu.dot_dimension_numbers<[1], [0], [0], [1], [0, 0, 1, 1], [], []>, precision = #tpu.contract_precision<fp32>} : vector<128x32xf32>, vector<32x128xf32>, vector<128x128xf32> -> vector<128x128xf32>
    %19 = arith.mulf %18, %18 : vector<128x128xf32>
    %cst_9 = arith.constant dense<0.000000e+00> : vector<128xf32>
    %20 = vector.multi_reduction <add>, %19, %cst_9 [1] : vector<128x128xf32> to vector<128xf32>
    %21 = vector.shape_cast %20 : vector<128xf32> to vector<128x1xf32>
    %c1_i32 = arith.constant 1 : i32
    %22 = vector.broadcast %c1_i32 : i32 to vector<128x1xi32>
    %23 = arith.cmpi eq, %6, %22 : vector<128x1xi32>
    %24 = vector.broadcast %3 : f32 to vector<128x1xf32>
    %25 = arith.cmpf ogt, %21, %24 : vector<128x1xf32>
    %26 = arith.andi %23, %25 : vector<128x1xi1>
    %c2_i32 = arith.constant 2 : i32
    %27 = vector.broadcast %c2_i32 : i32 to vector<128x1xi32>
    %28 = arith.cmpi eq, %6, %27 : vector<128x1xi32>
    %29 = vector.broadcast %3 : f32 to vector<128x1xf32>
    %30 = arith.cmpf olt, %21, %29 : vector<128x1xf32>
    %31 = arith.andi %28, %30 : vector<128x1xi1>
    %c0_10 = arith.constant 0 : index
    %c0_11 = arith.constant 0 : index
    %32 = vector.load %arg6[%c0_10, %c0_11] : memref<1x1xi32, #tpu.memory_space<vmem>>, vector<1x1xi32>
    %33 = arith.extui %26 : vector<128x1xi1> to vector<128x1xi32>
    %34 = vector.shape_cast %33 : vector<128x1xi32> to vector<1x128x1xi32>
    %cst_12 = arith.constant dense<0> : vector<1xi32>
    %35 = vector.multi_reduction <add>, %34, %cst_12 [1, 2] : vector<1x128x1xi32> to vector<1xi32>
    %36 = vector.shape_cast %35 : vector<1xi32> to vector<1x1x1xi32>
    %37 = vector.extract %36[0, 0, 0] : i32 from vector<1x1x1xi32>
    %38 = vector.broadcast %37 : i32 to vector<1x1xi32>
    %39 = arith.addi %32, %38 : vector<1x1xi32>
    %c0_13 = arith.constant 0 : index
    %c0_14 = arith.constant 0 : index
    %40 = vector.load %arg6[%c0_13, %c0_14] : memref<1x1xi32, #tpu.memory_space<vmem>>, vector<1x1xi32>
    tpu.vector_store %arg6[%c0_13, %c0_14], %39 {strides = array<i32>} : memref<1x1xi32, #tpu.memory_space<vmem>>, vector<1x1xi32>,
    %c0_15 = arith.constant 0 : index
    %c0_16 = arith.constant 0 : index
    %41 = vector.load %arg7[%c0_15, %c0_16] : memref<1x1xi32, #tpu.memory_space<vmem>>, vector<1x1xi32>
    %42 = arith.extui %31 : vector<128x1xi1> to vector<128x1xi32>
    %43 = vector.shape_cast %42 : vector<128x1xi32> to vector<1x128x1xi32>
    %cst_17 = arith.constant dense<0> : vector<1xi32>
    %44 = vector.multi_reduction <add>, %43, %cst_17 [1, 2] : vector<1x128x1xi32> to vector<1xi32>
    %45 = vector.shape_cast %44 : vector<1xi32> to vector<1x1x1xi32>
    %46 = vector.extract %45[0, 0, 0] : i32 from vector<1x1x1xi32>
    %47 = vector.broadcast %46 : i32 to vector<1x1xi32>
    %48 = arith.addi %41, %47 : vector<1x1xi32>
    %c0_18 = arith.constant 0 : index
    %c0_19 = arith.constant 0 : index
    %49 = vector.load %arg7[%c0_18, %c0_19] : memref<1x1xi32, #tpu.memory_space<vmem>>, vector<1x1xi32>
    tpu.vector_store %arg7[%c0_18, %c0_19], %48 {strides = array<i32>} : memref<1x1xi32, #tpu.memory_space<vmem>>, vector<1x1xi32>,
    return
  }
  func.func @transform_0(%arg0: i32) -> i32 {
    %c0_i32 = arith.constant 0 : i32
    %c0_i32_0 = arith.constant 0 : i32
    return %c0_i32 : i32
  }
  func.func @transform_1(%arg0: i32) -> (i32, i32) {
    %c0_i32 = arith.constant 0 : i32
    %c0_i32_0 = arith.constant 0 : i32
    return %arg0, %c0_i32 : i32, i32
  }
  func.func @transform_2(%arg0: i32) -> (i32, i32) {
    %c0_i32 = arith.constant 0 : i32
    %c0_i32_0 = arith.constant 0 : i32
    return %arg0, %c0_i32 : i32, i32
  }
  func.func @transform_3(%arg0: i32) -> (i32, i32) {
    %c0_i32 = arith.constant 0 : i32
    %c0_i32_0 = arith.constant 0 : i32
    return %arg0, %c0_i32 : i32, i32
  }
  func.func @transform_4(%arg0: i32) -> (i32, i32) {
    %c0_i32 = arith.constant 0 : i32
    %c0_i32_0 = arith.constant 0 : i32
    %c0_i32_1 = arith.constant 0 : i32
    return %c0_i32, %c0_i32_0 : i32, i32
  }
  func.func @transform_5(%arg0: i32) -> (i32, i32) {
    %c0_i32 = arith.constant 0 : i32
    %c0_i32_0 = arith.constant 0 : i32
    %c0_i32_1 = arith.constant 0 : i32
    return %c0_i32, %c0_i32_0 : i32, i32
  }
  func.func @transform_6(%arg0: i32) -> (i32, i32) {
    %c0_i32 = arith.constant 0 : i32
    %c0_i32_0 = arith.constant 0 : i32
    %c0_i32_1 = arith.constant 0 : i32
    return %c0_i32, %c0_i32_0 : i32, i32
  }
}

</mosaic_0001>

<llo_original>
// kernel: tpu_custom_call.1
$region0: #{tpu_custom_call.1}
  #allocation0 [shape = 'u32[]', space=smem, size = 0x4, offset = 0x4, fixed_abs, tag = 'smem constant byte address 0x4 - core index']
  #allocation1 [shape = 'u32[144,128]{1,0:T(1,128)}', space=vmem, size = 0x12000, scoped, tag = 'internal scratch']
  #allocation2 [shape = 'f32[1]{0:T(128)S(6)}', space=smem, size = 0x200, scoped, tag = 'scoped memory for tpu_custom_call.1']
  %s0 = inlined_call_operand.<no memory space> [shape: f32[1], index: 0, kind: input, shape index: {}]
  %s1 = inlined_call_operand.vmem [shape: s32[128,1], index: 1, kind: input, shape index: {}]
  %s2 = inlined_call_operand.vmem [shape: s32[128,1], index: 2, kind: input, shape index: {}]
  %s3 = inlined_call_operand.vmem [shape: s32[128,1], index: 3, kind: input, shape index: {}]
  %s4 = inlined_call_operand.vmem [shape: f32[32,128], index: 4, kind: input, shape index: {}]
  %s5 = inlined_call_operand.hbm [shape: s32[1,1], index: 5, kind: output, shape index: {0}]
  %s6 = inlined_call_operand.hbm [shape: s32[1,1], index: 6, kind: output, shape index: {1}]
  %7 = xla_tuple %s5, %s6
  %s8 = sld [smem:[#allocation0]]
  $region42: #{tpu_custom_call.1} parent=0
    _
  %s10 = ssub.s32 1, %s8
  %s11 = scalar_select 0, %s10, %s8
  %12 = sst [smem:[#allocation2]] %s0
  $region1: #{tpu_custom_call.1} parent=0
    #allocation3 [shape = 'u8[512]{0}', space=vmem, size = 0x400, scoped, tag = 'output window, operand 0, single buffered']
    #allocation4 [shape = 's32[1]{0}', space=sflag, size = 0x4, scoped, tag = 'scoped memory for tpu_custom_call.1']
    #allocation5 [shape = 'u8[512]{0}', space=vmem, size = 0x400, scoped, tag = 'output window, operand 1, single buffered']
    #allocation6 [shape = 's32[1]{0}', space=sflag, size = 0x4, scoped, tag = 'scoped memory for tpu_custom_call.1']
    %13 = vsyncpa [#allocation4], 0
    %14 = vsyncpa [#allocation6], 0
    // Predicated region
    $region2: #{tpu_custom_call.1} parent=1 // pred_check
      _
    $region3: #{tpu_custom_call.1} parent=1 // pred_check_branch
      %16 = sbr.rel (0) target = $region5
    $region4: #{tpu_custom_call.1} parent=1 // pred_region
      _
    $region5: #{tpu_custom_call.1} parent=1 // pred_fallthru
      _
    // Predicated region
    $region6: #{tpu_custom_call.1} parent=1 // pred_check
      _
    $region7: #{tpu_custom_call.1} parent=1 // pred_check_branch
      %18 = sbr.rel (0) target = $region9
    $region8: #{tpu_custom_call.1} parent=1 // pred_region
      _
    $region9: #{tpu_custom_call.1} parent=1 // pred_fallthru
      _
    // Predicated region
    $region10: #{tpu_custom_call.1} parent=1 // pred_check
      _
    $region11: #{tpu_custom_call.1} parent=1 // pred_check_branch
      %20 = sbr.rel (0) target = $region13
    $region12: #{tpu_custom_call.1} parent=1 // pred_region
      _
    $region13: #{tpu_custom_call.1} parent=1 // pred_fallthru
      _
    // Predicated region
    $region14: #{tpu_custom_call.1} parent=1 // pred_check
      _
    $region15: #{tpu_custom_call.1} parent=1 // pred_check_branch
      %22 = sbr.rel (0) target = $region17
    $region16: #{tpu_custom_call.1} parent=1 // pred_region
      _
    $region17: #{tpu_custom_call.1} parent=1 // pred_fallthru
      _
    // Predicated region
    $region18: #{tpu_custom_call.1} parent=1 // pred_check
      _
    $region19: #{tpu_custom_call.1} parent=1 // pred_check_branch
      %24 = sbr.rel (0) target = $region21
    $region20: #{tpu_custom_call.1} parent=1 // pred_region
      _
    $region21: #{tpu_custom_call.1} parent=1 // pred_fallthru
      _
    %p25 = scmp.eq.s32.totalorder 0, 0
    // Predicated region
    $region22: #{tpu_custom_call.1} parent=1 // pred_check
      %p26 = pneg %p25
    $region23: #{tpu_custom_call.1} parent=1 // pred_check_branch
      %28 = sbr.rel (%p26) target = $region25
    $region24: #{tpu_custom_call.1} parent=1 // pred_region
      %vm29 = vcmask 0
      %30 = vst.msk [vmem:[#allocation3] sm:$0x1] %vm29, 0
      %31 = vst.msk [vmem:[#allocation5] sm:$0x1] %vm29, 0
    $region25: #{tpu_custom_call.1} parent=1 // pred_fallthru
      _
    %s32 = sld [smem:[#allocation2]]
    %v33 = vld [vmem:[%s1] sm:$0xff]
    %v34 = vld [vmem:[%s1 + $0x8] sm:$0xff]
    %v35 = vld [vmem:[%s1 + $0x10] sm:$0xff]
    %v36 = vld [vmem:[%s1 + $0x18] sm:$0xff]
    %v37 = vld [vmem:[%s1 + $0x20] sm:$0xff]
    %v38 = vld [vmem:[%s1 + $0x28] sm:$0xff]
    %v39 = vld [vmem:[%s1 + $0x30] sm:$0xff]
    %v40 = vld [vmem:[%s1 + $0x38] sm:$0xff]
    %v41 = vld [vmem:[%s1 + $0x40] sm:$0xff]
    %v42 = vld [vmem:[%s1 + $0x48] sm:$0xff]
    %v43 = vld [vmem:[%s1 + $0x50] sm:$0xff]
    %v44 = vld [vmem:[%s1 + $0x58] sm:$0xff]
    %v45 = vld [vmem:[%s1 + $0x60] sm:$0xff]
    %v46 = vld [vmem:[%s1 + $0x68] sm:$0xff]
    %v47 = vld [vmem:[%s1 + $0x70] sm:$0xff]
    %v48 = vld [vmem:[%s1 + $0x78] sm:$0xff]
    %v49 = vld [vmem:[%s2] sm:$0xff]
    %v50 = vld [vmem:[%s2 + $0x8] sm:$0xff]
    %v51 = vld [vmem:[%s2 + $0x10] sm:$0xff]
    %v52 = vld [vmem:[%s2 + $0x18] sm:$0xff]
    %v53 = vld [vmem:[%s2 + $0x20] sm:$0xff]
    %v54 = vld [vmem:[%s2 + $0x28] sm:$0xff]
    %v55 = vld [vmem:[%s2 + $0x30] sm:$0xff]
    %v56 = vld [vmem:[%s2 + $0x38] sm:$0xff]
    %v57 = vld [vmem:[%s2 + $0x40] sm:$0xff]
    %v58 = vld [vmem:[%s2 + $0x48] sm:$0xff]
    %v59 = vld [vmem:[%s2 + $0x50] sm:$0xff]
    %v60 = vld [vmem:[%s2 + $0x58] sm:$0xff]
    %v61 = vld [vmem:[%s2 + $0x60] sm:$0xff]
    %v62 = vld [vmem:[%s2 + $0x68] sm:$0xff]
    %v63 = vld [vmem:[%s2 + $0x70] sm:$0xff]
    %v64 = vld [vmem:[%s2 + $0x78] sm:$0xff]
    %v65 = vld [vmem:[%s3] sm:$0xff]
    %v66 = vld [vmem:[%s3 + $0x8] sm:$0xff]
    %v67 = vld [vmem:[%s3 + $0x10] sm:$0xff]
    %v68 = vld [vmem:[%s3 + $0x18] sm:$0xff]
    %v69 = vld [vmem:[%s3 + $0x20] sm:$0xff]
    %v70 = vld [vmem:[%s3 + $0x28] sm:$0xff]
    %v71 = vld [vmem:[%s3 + $0x30] sm:$0xff]
    %v72 = vld [vmem:[%s3 + $0x38] sm:$0xff]
    %v73 = vld [vmem:[%s3 + $0x40] sm:$0xff]
    %v74 = vld [vmem:[%s3 + $0x48] sm:$0xff]
    %v75 = vld [vmem:[%s3 + $0x50] sm:$0xff]
    %v76 = vld [vmem:[%s3 + $0x58] sm:$0xff]
    %v77 = vld [vmem:[%s3 + $0x60] sm:$0xff]
    %v78 = vld [vmem:[%s3 + $0x68] sm:$0xff]
    %v79 = vld [vmem:[%s3 + $0x70] sm:$0xff]
    %v80 = vld [vmem:[%s3 + $0x78] sm:$0xff]
    %v81 = vlaneseq
    %v82 = vand.u32 %v81, 127
    %83 = vset.pattern.permute.xlu0 0
    %84 = vperm.xlu0 %83, %v33
    %v85 = vpop.permute.xlu0 %84
    %86 = vset.pattern.permute.xlu0 0
    %87 = vperm.xlu0 %86, %v34
    %v88 = vpop.permute.xlu0 %87
    %89 = vset.pattern.permute.xlu0 0
    %90 = vperm.xlu0 %89, %v35
    %v91 = vpop.permute.xlu0 %90
    %92 = vset.pattern.permute.xlu0 0
    %93 = vperm.xlu0 %92, %v36
    %v94 = vpop.permute.xlu0 %93
    %95 = vset.pattern.permute.xlu0 0
    %96 = vperm.xlu0 %95, %v37
    %v97 = vpop.permute.xlu0 %96
    %98 = vset.pattern.permute.xlu0 0
    %99 = vperm.xlu0 %98, %v38
    %v100 = vpop.permute.xlu0 %99
    %101 = vset.pattern.permute.xlu0 0
    %102 = vperm.xlu0 %101, %v39
    %v103 = vpop.permute.xlu0 %102
    %104 = vset.pattern.permute.xlu0 0
    %105 = vperm.xlu0 %104, %v40
    %v106 = vpop.permute.xlu0 %105
    %107 = vset.pattern.permute.xlu0 0
    %108 = vperm.xlu0 %107, %v41
    %v109 = vpop.permute.xlu0 %108
    %110 = vset.pattern.permute.xlu0 0
    %111 = vperm.xlu0 %110, %v42
    %v112 = vpop.permute.xlu0 %111
    %113 = vset.pattern.permute.xlu0 0
    %114 = vperm.xlu0 %113, %v43
    %v115 = vpop.permute.xlu0 %114
    %116 = vset.pattern.permute.xlu0 0
    %117 = vperm.xlu0 %116, %v44
    %v118 = vpop.permute.xlu0 %117
    %119 = vset.pattern.permute.xlu0 0
    %120 = vperm.xlu0 %119, %v45
    %v121 = vpop.permute.xlu0 %120
    %122 = vset.pattern.permute.xlu0 0
    %123 = vperm.xlu0 %122, %v46
    %v124 = vpop.permute.xlu0 %123
    %125 = vset.pattern.permute.xlu0 0
    %126 = vperm.xlu0 %125, %v47
    %v127 = vpop.permute.xlu0 %126
    %128 = vset.pattern.permute.xlu0 0
    %129 = vperm.xlu0 %128, %v48
    %v130 = vpop.permute.xlu0 %129
    %vm131 = vcmp.eq.s32.totalorder %v82, %v85
    %vm132 = vcmp.eq.s32.totalorder %v82, %v88
    %vm133 = vcmp.eq.s32.totalorder %v82, %v91
    %vm134 = vcmp.eq.s32.totalorder %v82, %v94
    %vm135 = vcmp.eq.s32.totalorder %v82, %v97
    %vm136 = vcmp.eq.s32.totalorder %v82, %v100
    %vm137 = vcmp.eq.s32.totalorder %v82, %v103
    %vm138 = vcmp.eq.s32.totalorder %v82, %v106
    %vm139 = vcmp.eq.s32.totalorder %v82, %v109
    %vm140 = vcmp.eq.s32.totalorder %v82, %v112
    %vm141 = vcmp.eq.s32.totalorder %v82, %v115
    %vm142 = vcmp.eq.s32.totalorder %v82, %v118
    %vm143 = vcmp.eq.s32.totalorder %v82, %v121
    %vm144 = vcmp.eq.s32.totalorder %v82, %v124
    %vm145 = vcmp.eq.s32.totalorder %v82, %v127
    %vm146 = vcmp.eq.s32.totalorder %v82, %v130
    %v147 = vsel %vm131, 1, 0
    %v148 = vsel %vm132, 1, 0
    %v149 = vsel %vm133, 1, 0
    %v150 = vsel %vm134, 1, 0
    %v151 = vsel %vm135, 1, 0
    %v152 = vsel %vm136, 1, 0
    %v153 = vsel %vm137, 1, 0
    %v154 = vsel %vm138, 1, 0
    %v155 = vsel %vm139, 1, 0
    %v156 = vsel %vm140, 1, 0
    %v157 = vsel %vm141, 1, 0
    %v158 = vsel %vm142, 1, 0
    %v159 = vsel %vm143, 1, 0
    %v160 = vsel %vm144, 1, 0
    %v161 = vsel %vm145, 1, 0
    %v162 = vsel %vm146, 1, 0
    %v163 = vcvt.s32.f32 %v147
    %v164 = vcvt.s32.f32 %v148
    %v165 = vcvt.s32.f32 %v149
    %v166 = vcvt.s32.f32 %v150
    %v167 = vcvt.s32.f32 %v151
    %v168 = vcvt.s32.f32 %v152
    %v169 = vcvt.s32.f32 %v153
    %v170 = vcvt.s32.f32 %v154
    %v171 = vcvt.s32.f32 %v155
    %v172 = vcvt.s32.f32 %v156
    %v173 = vcvt.s32.f32 %v157
    %v174 = vcvt.s32.f32 %v158
    %v175 = vcvt.s32.f32 %v159
    %v176 = vcvt.s32.f32 %v160
    %v177 = vcvt.s32.f32 %v161
    %v178 = vcvt.s32.f32 %v162
    %179 = vset.pattern.permute.xlu0 0
    %180 = vperm.xlu0 %179, %v49
    %v181 = vpop.permute.xlu0 %180
    %182 = vset.pattern.permute.xlu0 0
    %183 = vperm.xlu0 %182, %v50
    %v184 = vpop.permute.xlu0 %183
    %185 = vset.pattern.permute.xlu0 0
    %186 = vperm.xlu0 %185, %v51
    %v187 = vpop.permute.xlu0 %186
    %188 = vset.pattern.permute.xlu0 0
    %189 = vperm.xlu0 %188, %v52
    %v190 = vpop.permute.xlu0 %189
    %191 = vset.pattern.permute.xlu0 0
    %192 = vperm.xlu0 %191, %v53
    %v193 = vpop.permute.xlu0 %192
    %194 = vset.pattern.permute.xlu0 0
    %195 = vperm.xlu0 %194, %v54
    %v196 = vpop.permute.xlu0 %195
    %197 = vset.pattern.permute.xlu0 0
    %198 = vperm.xlu0 %197, %v55
    %v199 = vpop.permute.xlu0 %198
    %200 = vset.pattern.permute.xlu0 0
    %201 = vperm.xlu0 %200, %v56
    %v202 = vpop.permute.xlu0 %201
    %203 = vset.pattern.permute.xlu0 0
    %204 = vperm.xlu0 %203, %v57
    %v205 = vpop.permute.xlu0 %204
    %206 = vset.pattern.permute.xlu0 0
    %207 = vperm.xlu0 %206, %v58
    %v208 = vpop.permute.xlu0 %207
    %209 = vset.pattern.permute.xlu0 0
    %210 = vperm.xlu0 %209, %v59
    %v211 = vpop.permute.xlu0 %210
    %212 = vset.pattern.permute.xlu0 0
    %213 = vperm.xlu0 %212, %v60
    %v214 = vpop.permute.xlu0 %213
    %215 = vset.pattern.permute.xlu0 0
    %216 = vperm.xlu0 %215, %v61
    %v217 = vpop.permute.xlu0 %216
    %218 = vset.pattern.permute.xlu0 0
    %219 = vperm.xlu0 %218, %v62
    %v220 = vpop.permute.xlu0 %219
    %221 = vset.pattern.permute.xlu0 0
    %222 = vperm.xlu0 %221, %v63
    %v223 = vpop.permute.xlu0 %222
    %224 = vset.pattern.permute.xlu0 0
    %225 = vperm.xlu0 %224, %v64
    %v226 = vpop.permute.xlu0 %225
    %vm227 = vcmp.eq.s32.totalorder %v82, %v181
    %vm228 = vcmp.eq.s32.totalorder %v82, %v184
    %vm229 = vcmp.eq.s32.totalorder %v82, %v187
    %vm230 = vcmp.eq.s32.totalorder %v82, %v190
    %vm231 = vcmp.eq.s32.totalorder %v82, %v193
    %vm232 = vcmp.eq.s32.totalorder %v82, %v196
    %vm233 = vcmp.eq.s32.totalorder %v82, %v199
    %vm234 = vcmp.eq.s32.totalorder %v82, %v202
    %vm235 = vcmp.eq.s32.totalorder %v82, %v205
    %vm236 = vcmp.eq.s32.totalorder %v82, %v208
    %vm237 = vcmp.eq.s32.totalorder %v82, %v211
    %vm238 = vcmp.eq.s32.totalorder %v82, %v214
    %vm239 = vcmp.eq.s32.totalorder %v82, %v217
    %vm240 = vcmp.eq.s32.totalorder %v82, %v220
    %vm241 = vcmp.eq.s32.totalorder %v82, %v223
    %vm242 = vcmp.eq.s32.totalorder %v82, %v226
    %v243 = vsel %vm227, 1, 0
    %v244 = vsel %vm228, 1, 0
    %v245 = vsel %vm229, 1, 0
    %v246 = vsel %vm230, 1, 0
    %v247 = vsel %vm231, 1, 0
    %v248 = vsel %vm232, 1, 0
    %v249 = vsel %vm233, 1, 0
    %v250 = vsel %vm234, 1, 0
    %v251 = vsel %vm235, 1, 0
    %v252 = vsel %vm236, 1, 0
    %v253 = vsel %vm237, 1, 0
    %v254 = vsel %vm238, 1, 0
    %v255 = vsel %vm239, 1, 0
    %v256 = vsel %vm240, 1, 0
    %v257 = vsel %vm241, 1, 0
    %v258 = vsel %vm242, 1, 0
    %v259 = vcvt.s32.f32 %v243
    %v260 = vcvt.s32.f32 %v244
    %v261 = vcvt.s32.f32 %v245
    %v262 = vcvt.s32.f32 %v246
    %v263 = vcvt.s32.f32 %v247
    %v264 = vcvt.s32.f32 %v248
    %v265 = vcvt.s32.f32 %v249
    %v266 = vcvt.s32.f32 %v250
    %v267 = vcvt.s32.f32 %v251
    %v268 = vcvt.s32.f32 %v252
    %v269 = vcvt.s32.f32 %v253
    %v270 = vcvt.s32.f32 %v254
    %v271 = vcvt.s32.f32 %v255
    %v272 = vcvt.s32.f32 %v256
    %v273 = vcvt.s32.f32 %v257
    %v274 = vcvt.s32.f32 %v258
    %v275 = vsub.f32 %v163, %v259
    %v276 = vsub.f32 %v164, %v260
    %v277 = vsub.f32 %v165, %v261
    %v278 = vsub.f32 %v166, %v262
    %v279 = vsub.f32 %v167, %v263
    %v280 = vsub.f32 %v168, %v264
    %v281 = vsub.f32 %v169, %v265
    %v282 = vsub.f32 %v170, %v266
    %v283 = vsub.f32 %v171, %v267
    %v284 = vsub.f32 %v172, %v268
    %v285 = vsub.f32 %v173, %v269
    %v286 = vsub.f32 %v174, %v270
    %v287 = vsub.f32 %v175, %v271
    %v288 = vsub.f32 %v176, %v272
    %v289 = vsub.f32 %v177, %v273
    %v290 = vsub.f32 %v178, %v274
    %v291 = vld [vmem:[%s4] sm:$0xff]
    %v292 = vld [vmem:[%s4 + $0x8] sm:$0xff]
    %v293 = vld [vmem:[%s4 + $0x10] sm:$0xff]
    %v294 = vld [vmem:[%s4 + $0x18] sm:$0xff]
    %vm295 = vcmask 261120
    %v297 = vsel %vm295, %v275, 0
    %v300 = vsel %vm295, %v276, 0
    %v303 = vsel %vm295, %v277, 0
    %v306 = vsel %vm295, %v278, 0
    %v309 = vsel %vm295, %v279, 0
    %v312 = vsel %vm295, %v280, 0
    %v315 = vsel %vm295, %v281, 0
    %v318 = vsel %vm295, %v282, 0
    %v321 = vsel %vm295, %v283, 0
    %v324 = vsel %vm295, %v284, 0
    %v327 = vsel %vm295, %v285, 0
    %v330 = vsel %vm295, %v286, 0
    %v333 = vsel %vm295, %v287, 0
    %v336 = vsel %vm295, %v288, 0
    %v339 = vsel %vm295, %v289, 0
    %v342 = vsel %vm295, %v290, 0
    %344 = vmatprep.subr.mxu0 0.0
    %v345 = vand.u32 %v291, 4294901760
    %346 = vmatpush1.msra.mxu0 %v345
    %347 = vmatprep.subr.mxu0 0.0
    %v348 = vand.u32 %v292, 4294901760
    %349 = vmatpush1.msra.mxu0 %v348
    %350 = vmatprep.subr.mxu0 0.0
    %v351 = vand.u32 %v293, 4294901760
    %352 = vmatpush1.msra.mxu0 %v351
    %353 = vmatprep.subr.mxu0 0.0
    %v354 = vand.u32 %v294, 4294901760
    %355 = vmatpush1.msra.mxu0 %v354
    %356 = vmatprep.subr.mxu0 0.0
    %357 = vmatpush1.msra.mxu0 0.0
    %358 = vmatprep.subr.mxu0 0.0
    %359 = vmatpush1.msra.mxu0 0.0
    %360 = vmatprep.subr.mxu0 0.0
    %361 = vmatpush1.msra.mxu0 0.0
    %362 = vmatprep.subr.mxu0 0.0
    %363 = vmatpush1.msra.mxu0 0.0
    %364 = vmatprep.subr.mxu0 0.0
    %365 = vmatpush1.msra.mxu0 0.0
    %366 = vmatprep.subr.mxu0 0.0
    %367 = vmatpush1.msra.mxu0 0.0
    %368 = vmatprep.subr.mxu0 0.0
    %369 = vmatpush1.msra.mxu0 0.0
    %370 = vmatprep.subr.mxu0 0.0
    %371 = vmatpush1.msra.mxu0 0.0
    %372 = vmatprep.subr.mxu0 0.0
    %373 = vmatpush1.msra.mxu0 0.0
    %374 = vmatprep.subr.mxu0 0.0
    %375 = vmatpush1.msra.mxu0 0.0
    %376 = vmatprep.subr.mxu0 0.0
    %377 = vmatpush1.msra.mxu0 0.0
    %378 = vmatprep.subr.mxu0 0.0
    %379 = vmatpush1.msra.mxu0 0.0
    %380 = vmatprep.subr.mxu0 0.0
    %381 = vmatpush1.msra.mxu0 0.0
    %382 = vmatprep.subr.mxu0 0.0
    %383 = vmatpush1.msra.mxu0 0.0
    %384 = vmatprep.subr.mxu0 0.0
    %385 = vmatpush1.msra.mxu0 0.0
    %386 = vmatprep.subr.mxu0 0.0
    %387 = vmatpush1.msra.mxu0 0.0
    %388 = vmatprep.subr.mxu0 0.0
    %389 = vmatpush1.msra.mxu0 0.0
    %390 = vmatprep.subr.mxu0 0.0
    %391 = vmatpush1.msra.mxu0 0.0
    %392 = vmatprep.subr.mxu0 0.0
    %393 = vmatpush1.msra.mxu0 0.0
    %394 = vmatprep.subr.mxu0 0.0
    %395 = vmatpush1.msra.mxu0 0.0
    %396 = vmatprep.subr.mxu0 0.0
    %397 = vmatpush1.msra.mxu0 0.0
    %398 = vmatprep.subr.mxu0 0.0
    %399 = vmatpush1.msra.mxu0 0.0
    %400 = vmatprep.subr.mxu0 0.0
    %401 = vmatpush1.msra.mxu0 0.0
    %402 = vmatprep.subr.mxu0 0.0
    %403 = vmatpush1.msra.mxu0 0.0
    %404 = vmatprep.subr.mxu0 0.0
    %405 = vmatpush1.msra.mxu0 0.0
    %406 = vmatprep.subr.mxu0 0.0
    %407 = vmatpush1.msra.mxu0 0.0
    %408 = vmatprep.subr.mxu0 0.0
    %409 = vmatpush1.msra.mxu0 0.0
    %410 = vmatprep.subr.mxu0 0.0
    %411 = vmatpush1.msra.mxu0 0.0
    %412 = vmatprep.mubr.f32.mxu0 0.0
    %v413 = vand.u32 %v297, 4294901760
    %v414 = vsub.f32 %v297, %v413
    %v415 = vand.u32 %v414, 4294901760
    %v416 = vsub.f32 %v414, %v415
    %v417 = vand.u32 %v416, 4294901760
    %418 = vmatmul.mubr.f32.gmra.mrb[0].mxu0 %v417
    %v419 = vpop.f32.mrb[0].mxu0
    %v420 = vadd.f32 0.0, %v419
    %v421 = vpop.f32.mrb[0].mxu0
    %422 = vmatprep.mubr.f32.mxu0 0.0
    %v423 = vand.u32 %v300, 4294901760
    %v424 = vsub.f32 %v300, %v423
    %v425 = vand.u32 %v424, 4294901760
    %v426 = vsub.f32 %v424, %v425
    %v427 = vand.u32 %v426, 4294901760
    %428 = vmatmul.mubr.f32.gmra.mrb[0].mxu0 %v427
    %v429 = vpop.f32.mrb[0].mxu0
    %v430 = vadd.f32 0.0, %v429
    %v431 = vpop.f32.mrb[0].mxu0
    %432 = vmatprep.mubr.f32.mxu0 0.0
    %v433 = vand.u32 %v303, 4294901760
    %v434 = vsub.f32 %v303, %v433
    %v435 = vand.u32 %v434, 4294901760
    %v436 = vsub.f32 %v434, %v435
    %v437 = vand.u32 %v436, 4294901760
    %438 = vmatmul.mubr.f32.gmra.mrb[0].mxu0 %v437
    %v439 = vpop.f32.mrb[0].mxu0
    %v440 = vadd.f32 0.0, %v439
    %v441 = vpop.f32.mrb[0].mxu0
    %442 = vmatprep.mubr.f32.mxu0 0.0
    %v443 = vand.u32 %v306, 4294901760
    %v444 = vsub.f32 %v306, %v443
    %v445 = vand.u32 %v444, 4294901760
    %v446 = vsub.f32 %v444, %v445
    %v447 = vand.u32 %v446, 4294901760
    %448 = vmatmul.mubr.f32.gmra.mrb[0].mxu0 %v447
    %v449 = vpop.f32.mrb[0].mxu0
    %v450 = vadd.f32 0.0, %v449
    %v451 = vpop.f32.mrb[0].mxu0
    %452 = vmatprep.mubr.f32.mxu0 0.0
    %v453 = vand.u32 %v309, 4294901760
    %v454 = vsub.f32 %v309, %v453
    %v455 = vand.u32 %v454, 4294901760
    %v456 = vsub.f32 %v454, %v455
    %v457 = vand.u32 %v456, 4294901760
    %458 = vmatmul.mubr.f32.gmra.mrb[0].mxu0 %v457
    %v459 = vpop.f32.mrb[0].mxu0
    %v460 = vadd.f32 0.0, %v459
    %v461 = vpop.f32.mrb[0].mxu0
    %462 = vmatprep.mubr.f32.mxu0 0.0
    %v463 = vand.u32 %v312, 4294901760
    %v464 = vsub.f32 %v312, %v463
    %v465 = vand.u32 %v464, 4294901760
    %v466 = vsub.f32 %v464, %v465
    %v467 = vand.u32 %v466, 4294901760
    %468 = vmatmul.mubr.f32.gmra.mrb[0].mxu0 %v467
    %v469 = vpop.f32.mrb[0].mxu0
    %v470 = vadd.f32 0.0, %v469
    %v471 = vpop.f32.mrb[0].mxu0
    %472 = vmatprep.mubr.f32.mxu0 0.0
    %v473 = vand.u32 %v315, 4294901760
    %v474 = vsub.f32 %v315, %v473
    %v475 = vand.u32 %v474, 4294901760
    %v476 = vsub.f32 %v474, %v475
    %v477 = vand.u32 %v476, 4294901760
    %478 = vmatmul.mubr.f32.gmra.mrb[0].mxu0 %v477
    %v479 = vpop.f32.mrb[0].mxu0
    %v480 = vadd.f32 0.0, %v479
    %v481 = vpop.f32.mrb[0].mxu0
    %482 = vmatprep.mubr.f32.mxu0 0.0
    %v483 = vand.u32 %v318, 4294901760
    %v484 = vsub.f32 %v318, %v483
    %v485 = vand.u32 %v484, 4294901760
    %v486 = vsub.f32 %v484, %v485
    %v487 = vand.u32 %v486, 4294901760
    %488 = vmatmul.mubr.f32.gmra.mrb[0].mxu0 %v487
    %v489 = vpop.f32.mrb[0].mxu0
    %v490 = vadd.f32 0.0, %v489
    %v491 = vpop.f32.mrb[0].mxu0
    %492 = vmatprep.mubr.f32.mxu0 0.0
    %v493 = vand.u32 %v321, 4294901760
    %v494 = vsub.f32 %v321, %v493
    %v495 = vand.u32 %v494, 4294901760
    %v496 = vsub.f32 %v494, %v495
    %v497 = vand.u32 %v496, 4294901760
    %498 = vmatmul.mubr.f32.gmra.mrb[0].mxu0 %v497
    %v499 = vpop.f32.mrb[0].mxu0
    %v500 = vadd.f32 0.0, %v499
    %v501 = vpop.f32.mrb[0].mxu0
    %502 = vmatprep.mubr.f32.mxu0 0.0
    %v503 = vand.u32 %v324, 4294901760
    %v504 = vsub.f32 %v324, %v503
    %v505 = vand.u32 %v504, 4294901760
    %v506 = vsub.f32 %v504, %v505
    %v507 = vand.u32 %v506, 4294901760
    %508 = vmatmul.mubr.f32.gmra.mrb[0].mxu0 %v507
    %v509 = vpop.f32.mrb[0].mxu0
    %v510 = vadd.f32 0.0, %v509
    %v511 = vpop.f32.mrb[0].mxu0
    %512 = vmatprep.mubr.f32.mxu0 0.0
    %v513 = vand.u32 %v327, 4294901760
    %v514 = vsub.f32 %v327, %v513
    %v515 = vand.u32 %v514, 4294901760
    %v516 = vsub.f32 %v514, %v515
    %v517 = vand.u32 %v516, 4294901760
    %518 = vmatmul.mubr.f32.gmra.mrb[0].mxu0 %v517
    %v519 = vpop.f32.mrb[0].mxu0
    %v520 = vadd.f32 0.0, %v519
    %v521 = vpop.f32.mrb[0].mxu0
    %522 = vmatprep.mubr.f32.mxu0 0.0
    %v523 = vand.u32 %v330, 4294901760
    %v524 = vsub.f32 %v330, %v523
    %v525 = vand.u32 %v524, 4294901760
    %v526 = vsub.f32 %v524, %v525
    %v527 = vand.u32 %v526, 4294901760
    %528 = vmatmul.mubr.f32.gmra.mrb[0].mxu0 %v527
    %v529 = vpop.f32.mrb[0].mxu0
    %v530 = vadd.f32 0.0, %v529
    %v531 = vpop.f32.mrb[0].mxu0
    %532 = vmatprep.mubr.f32.mxu0 0.0
    %v533 = vand.u32 %v333, 4294901760
    %v534 = vsub.f32 %v333, %v533
    %v535 = vand.u32 %v534, 4294901760
    %v536 = vsub.f32 %v534, %v535
    %v537 = vand.u32 %v536, 4294901760
    %538 = vmatmul.mubr.f32.gmra.mrb[0].mxu0 %v537
    %v539 = vpop.f32.mrb[0].mxu0
    %v540 = vadd.f32 0.0, %v539
    %v541 = vpop.f32.mrb[0].mxu0
    %542 = vmatprep.mubr.f32.mxu0 0.0
    %v543 = vand.u32 %v336, 4294901760
    %v544 = vsub.f32 %v336, %v543
    %v545 = vand.u32 %v544, 4294901760
    %v546 = vsub.f32 %v544, %v545
    %v547 = vand.u32 %v546, 4294901760
    %548 = vmatmul.mubr.f32.gmra.mrb[0].mxu0 %v547
    %v549 = vpop.f32.mrb[0].mxu0
    %v550 = vadd.f32 0.0, %v549
    %v551 = vpop.f32.mrb[0].mxu0
    %552 = vmatprep.mubr.f32.mxu0 0.0
    %v553 = vand.u32 %v339, 4294901760
    %v554 = vsub.f32 %v339, %v553
    %v555 = vand.u32 %v554, 4294901760
    %v556 = vsub.f32 %v554, %v555
    %v557 = vand.u32 %v556, 4294901760
    %558 = vmatmul.mubr.f32.gmra.mrb[0].mxu0 %v557
    %v559 = vpop.f32.mrb[0].mxu0
    %v560 = vadd.f32 0.0, %v559
    %v561 = vpop.f32.mrb[0].mxu0
    %562 = vmatprep.mubr.f32.mxu0 0.0
    %v563 = vand.u32 %v342, 4294901760
    %v564 = vsub.f32 %v342, %v563
    %v565 = vand.u32 %v564, 4294901760
    %v566 = vsub.f32 %v564, %v565
    %v567 = vand.u32 %v566, 4294901760
    %568 = vmatmul.mubr.f32.gmra.mrb[0].mxu0 %v567
    %v569 = vpop.f32.mrb[0].mxu0
    %v570 = vadd.f32 0.0, %v569
    %v571 = vpop.f32.mrb[0].mxu0
    %572 = vdwg.mxu0
    %573 = vmatprep.subr.mxu0 0.0
    %v574 = vand.u32 %v291, 4294901760
    %v575 = vsub.f32 %v291, %v574
    %v576 = vand.u32 %v575, 4294901760
    %v577 = vsub.f32 %v575, %v576
    %v578 = vand.u32 %v577, 4294901760
    %579 = vmatpush1.msra.mxu0 %v578
    %580 = vmatprep.subr.mxu0 0.0
    %v581 = vand.u32 %v292, 4294901760
    %v582 = vsub.f32 %v292, %v581
    %v583 = vand.u32 %v582, 4294901760
    %v584 = vsub.f32 %v582, %v583
    %v585 = vand.u32 %v584, 4294901760
    %586 = vmatpush1.msra.mxu0 %v585
    %587 = vmatprep.subr.mxu0 0.0
    %v588 = vand.u32 %v293, 4294901760
    %v589 = vsub.f32 %v293, %v588
    %v590 = vand.u32 %v589, 4294901760
    %v591 = vsub.f32 %v589, %v590
    %v592 = vand.u32 %v591, 4294901760
    %593 = vmatpush1.msra.mxu0 %v592
    %594 = vmatprep.subr.mxu0 0.0
    %v595 = vand.u32 %v294, 4294901760
    %v596 = vsub.f32 %v294, %v595
    %v597 = vand.u32 %v596, 4294901760
    %v598 = vsub.f32 %v596, %v597
    %v599 = vand.u32 %v598, 4294901760
    %600 = vmatpush1.msra.mxu0 %v599
    %601 = vmatprep.subr.mxu0 0.0
    %602 = vmatpush1.msra.mxu0 0.0
    %603 = vmatprep.subr.mxu0 0.0
    %604 = vmatpush1.msra.mxu0 0.0
    %605 = vmatprep.subr.mxu0 0.0
    %606 = vmatpush1.msra.mxu0 0.0
    %607 = vmatprep.subr.mxu0 0.0
    %608 = vmatpush1.msra.mxu0 0.0
    %609 = vmatprep.subr.mxu0 0.0
    %610 = vmatpush1.msra.mxu0 0.0
    %611 = vmatprep.subr.mxu0 0.0
    %612 = vmatpush1.msra.mxu0 0.0
    %613 = vmatprep.subr.mxu0 0.0
    %614 = vmatpush1.msra.mxu0 0.0
    %615 = vmatprep.subr.mxu0 0.0
    %616 = vmatpush1.msra.mxu0 0.0
    %617 = vmatprep.subr.mxu0 0.0
    %618 = vmatpush1.msra.mxu0 0.0
    %619 = vmatprep.subr.mxu0 0.0
    %620 = vmatpush1.msra.mxu0 0.0
    %621 = vmatprep.subr.mxu0 0.0
    %622 = vmatpush1.msra.mxu0 0.0
    %623 = vmatprep.subr.mxu0 0.0
    %624 = vmatpush1.msra.mxu0 0.0
    %625 = vmatprep.subr.mxu0 0.0
    %626 = vmatpush1.msra.mxu0 0.0
    %627 = vmatprep.subr.mxu0 0.0
    %628 = vmatpush1.msra.mxu0 0.0
    %629 = vmatprep.subr.mxu0 0.0
    %630 = vmatpush1.msra.mxu0 0.0
    %631 = vmatprep.subr.mxu0 0.0
    %632 = vmatpush1.msra.mxu0 0.0
    %633 = vmatprep.subr.mxu0 0.0
    %634 = vmatpush1.msra.mxu0 0.0
    %635 = vmatprep.subr.mxu0 0.0
    %636 = vmatpush1.msra.mxu0 0.0
    %637 = vmatprep.subr.mxu0 0.0
    %638 = vmatpush1.msra.mxu0 0.0
    %639 = vmatprep.subr.mxu0 0.0
    %640 = vmatpush1.msra.mxu0 0.0
    %641 = vmatprep.subr.mxu0 0.0
    %642 = vmatpush1.msra.mxu0 0.0
    %643 = vmatprep.subr.mxu0 0.0
    %644 = vmatpush1.msra.mxu0 0.0
    %645 = vmatprep.subr.mxu0 0.0
    %646 = vmatpush1.msra.mxu0 0.0
    %647 = vmatprep.subr.mxu0 0.0
    %648 = vmatpush1.msra.mxu0 0.0
    %649 = vmatprep.subr.mxu0 0.0
    %650 = vmatpush1.msra.mxu0 0.0
    %651 = vmatprep.subr.mxu0 0.0
    %652 = vmatpush1.msra.mxu0 0.0
    %653 = vmatprep.subr.mxu0 0.0
    %654 = vmatpush1.msra.mxu0 0.0
    %655 = vmatprep.subr.mxu0 0.0
    %656 = vmatpush1.msra.mxu0 0.0
    %657 = vmatprep.mubr.f32.mxu0 0.0
    %v658 = vand.u32 %v297, 4294901760
    %659 = vmatmul.mubr.f32.gmra.mrb[0].mxu0 %v658
    %v660 = vpop.f32.mrb[0].mxu0
    %v661 = vadd.f32 %v420, %v660
    %v662 = vpop.f32.mrb[0].mxu0
    %663 = vmatprep.mubr.f32.mxu0 0.0
    %v664 = vand.u32 %v300, 4294901760
    %665 = vmatmul.mubr.f32.gmra.mrb[0].mxu0 %v664
    %v666 = vpop.f32.mrb[0].mxu0
    %v667 = vadd.f32 %v430, %v666
    %v668 = vpop.f32.mrb[0].mxu0
    %669 = vmatprep.mubr.f32.mxu0 0.0
    %v670 = vand.u32 %v303, 4294901760
    %671 = vmatmul.mubr.f32.gmra.mrb[0].mxu0 %v670
    %v672 = vpop.f32.mrb[0].mxu0
    %v673 = vadd.f32 %v440, %v672
    %v674 = vpop.f32.mrb[0].mxu0
    %675 = vmatprep.mubr.f32.mxu0 0.0
    %v676 = vand.u32 %v306, 4294901760
    %677 = vmatmul.mubr.f32.gmra.mrb[0].mxu0 %v676
    %v678 = vpop.f32.mrb[0].mxu0
    %v679 = vadd.f32 %v450, %v678
    %v680 = vpop.f32.mrb[0].mxu0
    %681 = vmatprep.mubr.f32.mxu0 0.0
    %v682 = vand.u32 %v309, 4294901760
    %683 = vmatmul.mubr.f32.gmra.mrb[0].mxu0 %v682
    %v684 = vpop.f32.mrb[0].mxu0
    %v685 = vadd.f32 %v460, %v684
    %v686 = vpop.f32.mrb[0].mxu0
    %687 = vmatprep.mubr.f32.mxu0 0.0
    %v688 = vand.u32 %v312, 4294901760
    %689 = vmatmul.mubr.f32.gmra.mrb[0].mxu0 %v688
    %v690 = vpop.f32.mrb[0].mxu0
    %v691 = vadd.f32 %v470, %v690
    %v692 = vpop.f32.mrb[0].mxu0
    %693 = vmatprep.mubr.f32.mxu0 0.0
    %v694 = vand.u32 %v315, 4294901760
    %695 = vmatmul.mubr.f32.gmra.mrb[0].mxu0 %v694
    %v696 = vpop.f32.mrb[0].mxu0
    %v697 = vadd.f32 %v480, %v696
    %v698 = vpop.f32.mrb[0].mxu0
    %699 = vmatprep.mubr.f32.mxu0 0.0
    %v700 = vand.u32 %v318, 4294901760
    %701 = vmatmul.mubr.f32.gmra.mrb[0].mxu0 %v700
    %v702 = vpop.f32.mrb[0].mxu0
    %v703 = vadd.f32 %v490, %v702
    %v704 = vpop.f32.mrb[0].mxu0
    %705 = vmatprep.mubr.f32.mxu0 0.0
    %v706 = vand.u32 %v321, 4294901760
    %707 = vmatmul.mubr.f32.gmra.mrb[0].mxu0 %v706
    %v708 = vpop.f32.mrb[0].mxu0
    %v709 = vadd.f32 %v500, %v708
    %v710 = vpop.f32.mrb[0].mxu0
    %711 = vmatprep.mubr.f32.mxu0 0.0
    %v712 = vand.u32 %v324, 4294901760
    %713 = vmatmul.mubr.f32.gmra.mrb[0].mxu0 %v712
    %v714 = vpop.f32.mrb[0].mxu0
    %v715 = vadd.f32 %v510, %v714
    %v716 = vpop.f32.mrb[0].mxu0
    %717 = vmatprep.mubr.f32.mxu0 0.0
    %v718 = vand.u32 %v327, 4294901760
    %719 = vmatmul.mubr.f32.gmra.mrb[0].mxu0 %v718
    %v720 = vpop.f32.mrb[0].mxu0
    %v721 = vadd.f32 %v520, %v720
    %v722 = vpop.f32.mrb[0].mxu0
    %723 = vmatprep.mubr.f32.mxu0 0.0
    %v724 = vand.u32 %v330, 4294901760
    %725 = vmatmul.mubr.f32.gmra.mrb[0].mxu0 %v724
    %v726 = vpop.f32.mrb[0].mxu0
    %v727 = vadd.f32 %v530, %v726
    %v728 = vpop.f32.mrb[0].mxu0
    %729 = vmatprep.mubr.f32.mxu0 0.0
    %v730 = vand.u32 %v333, 4294901760
    %731 = vmatmul.mubr.f32.gmra.mrb[0].mxu0 %v730
    %v732 = vpop.f32.mrb[0].mxu0
    %v733 = vadd.f32 %v540, %v732
    %v734 = vpop.f32.mrb[0].mxu0
    %735 = vmatprep.mubr.f32.mxu0 0.0
    %v736 = vand.u32 %v336, 4294901760
    %737 = vmatmul.mubr.f32.gmra.mrb[0].mxu0 %v736
    %v738 = vpop.f32.mrb[0].mxu0
    %v739 = vadd.f32 %v550, %v738
    %v740 = vpop.f32.mrb[0].mxu0
    %741 = vmatprep.mubr.f32.mxu0 0.0
    %v742 = vand.u32 %v339, 4294901760
    %743 = vmatmul.mubr.f32.gmra.mrb[0].mxu0 %v742
    %v744 = vpop.f32.mrb[0].mxu0
    %v745 = vadd.f32 %v560, %v744
    %v746 = vpop.f32.mrb[0].mxu0
    %747 = vmatprep.mubr.f32.mxu0 0.0
    %v748 = vand.u32 %v342, 4294901760
    %749 = vmatmul.mubr.f32.gmra.mrb[0].mxu0 %v748
    %v750 = vpop.f32.mrb[0].mxu0
    %v751 = vadd.f32 %v570, %v750
    %v752 = vpop.f32.mrb[0].mxu0
    %753 = vdwg.mxu0
    %754 = vmatprep.subr.mxu0 0.0
    %v755 = vand.u32 %v291, 4294901760
    %v756 = vsub.f32 %v291, %v755
    %757 = vmatpush1.msra.mxu0 %v756
    %758 = vmatprep.subr.mxu0 0.0
    %v759 = vand.u32 %v292, 4294901760
    %v760 = vsub.f32 %v292, %v759
    %761 = vmatpush1.msra.mxu0 %v760
    %762 = vmatprep.subr.mxu0 0.0
    %v763 = vand.u32 %v293, 4294901760
    %v764 = vsub.f32 %v293, %v763
    %765 = vmatpush1.msra.mxu0 %v764
    %766 = vmatprep.subr.mxu0 0.0
    %v767 = vand.u32 %v294, 4294901760
    %v768 = vsub.f32 %v294, %v767
    %769 = vmatpush1.msra.mxu0 %v768
    %770 = vmatprep.subr.mxu0 0.0
    %771 = vmatpush1.msra.mxu0 0.0
    %772 = vmatprep.subr.mxu0 0.0
    %773 = vmatpush1.msra.mxu0 0.0
    %774 = vmatprep.subr.mxu0 0.0
    %775 = vmatpush1.msra.mxu0 0.0
    %776 = vmatprep.subr.mxu0 0.0
    %777 = vmatpush1.msra.mxu0 0.0
    %778 = vmatprep.subr.mxu0 0.0
    %779 = vmatpush1.msra.mxu0 0.0
    %780 = vmatprep.subr.mxu0 0.0
    %781 = vmatpush1.msra.mxu0 0.0
    %782 = vmatprep.subr.mxu0 0.0
    %783 = vmatpush1.msra.mxu0 0.0
    %784 = vmatprep.subr.mxu0 0.0
    %785 = vmatpush1.msra.mxu0 0.0
    %786 = vmatprep.subr.mxu0 0.0
    %787 = vmatpush1.msra.mxu0 0.0
    %788 = vmatprep.subr.mxu0 0.0
    %789 = vmatpush1.msra.mxu0 0.0
    %790 = vmatprep.subr.mxu0 0.0
    %791 = vmatpush1.msra.mxu0 0.0
    %792 = vmatprep.subr.mxu0 0.0
    %793 = vmatpush1.msra.mxu0 0.0
    %794 = vmatprep.subr.mxu0 0.0
    %795 = vmatpush1.msra.mxu0 0.0
    %796 = vmatprep.subr.mxu0 0.0
    %797 = vmatpush1.msra.mxu0 0.0
    %798 = vmatprep.subr.mxu0 0.0
    %799 = vmatpush1.msra.mxu0 0.0
    %800 = vmatprep.subr.mxu0 0.0
    %801 = vmatpush1.msra.mxu0 0.0
    %802 = vmatprep.subr.mxu0 0.0
    %803 = vmatpush1.msra.mxu0 0.0
    %804 = vmatprep.subr.mxu0 0.0
    %805 = vmatpush1.msra.mxu0 0.0
    %806 = vmatprep.subr.mxu0 0.0
    %807 = vmatpush1.msra.mxu0 0.0
    %808 = vmatprep.subr.mxu0 0.0
    %809 = vmatpush1.msra.mxu0 0.0
    %810 = vmatprep.subr.mxu0 0.0
    %811 = vmatpush1.msra.mxu0 0.0
    %812 = vmatprep.subr.mxu0 0.0
    %813 = vmatpush1.msra.mxu0 0.0
    %814 = vmatprep.subr.mxu0 0.0
    %815 = vmatpush1.msra.mxu0 0.0
    %816 = vmatprep.subr.mxu0 0.0
    %817 = vmatpush1.msra.mxu0 0.0
    %818 = vmatprep.subr.mxu0 0.0
    %819 = vmatpush1.msra.mxu0 0.0
    %820 = vmatprep.subr.mxu0 0.0
    %821 = vmatpush1.msra.mxu0 0.0
    %822 = vmatprep.subr.mxu0 0.0
    %823 = vmatpush1.msra.mxu0 0.0
    %824 = vmatprep.subr.mxu0 0.0
    %825 = vmatpush1.msra.mxu0 0.0
    %826 = vmatprep.mubr.f32.mxu0 0.0
    %v827 = vand.u32 %v297, 4294901760
    %v828 = vsub.f32 %v297, %v827
    %829 = vmatmul.mubr.f32.gmra.mrb[0].mxu0 %v828
    %v830 = vpop.f32.mrb[0].mxu0
    %v831 = vadd.f32 %v661, %v830
    %v832 = vpop.f32.mrb[0].mxu0
    %833 = vmatprep.mubr.f32.mxu0 0.0
    %v834 = vand.u32 %v300, 4294901760
    %v835 = vsub.f32 %v300, %v834
    %836 = vmatmul.mubr.f32.gmra.mrb[0].mxu0 %v835
    %v837 = vpop.f32.mrb[0].mxu0
    %v838 = vadd.f32 %v667, %v837
    %v839 = vpop.f32.mrb[0].mxu0
    %840 = vmatprep.mubr.f32.mxu0 0.0
    %v841 = vand.u32 %v303, 4294901760
    %v842 = vsub.f32 %v303, %v841
    %843 = vmatmul.mubr.f32.gmra.mrb[0].mxu0 %v842
    %v844 = vpop.f32.mrb[0].mxu0
    %v845 = vadd.f32 %v673, %v844
    %v846 = vpop.f32.mrb[0].mxu0
    %847 = vmatprep.mubr.f32.mxu0 0.0
    %v848 = vand.u32 %v306, 4294901760
    %v849 = vsub.f32 %v306, %v848
    %850 = vmatmul.mubr.f32.gmra.mrb[0].mxu0 %v849
    %v851 = vpop.f32.mrb[0].mxu0
    %v852 = vadd.f32 %v679, %v851
    %v853 = vpop.f32.mrb[0].mxu0
    %854 = vmatprep.mubr.f32.mxu0 0.0
    %v855 = vand.u32 %v309, 4294901760
    %v856 = vsub.f32 %v309, %v855
    %857 = vmatmul.mubr.f32.gmra.mrb[0].mxu0 %v856
    %v858 = vpop.f32.mrb[0].mxu0
    %v859 = vadd.f32 %v685, %v858
    %v860 = vpop.f32.mrb[0].mxu0
    %861 = vmatprep.mubr.f32.mxu0 0.0
    %v862 = vand.u32 %v312, 4294901760
    %v863 = vsub.f32 %v312, %v862
    %864 = vmatmul.mubr.f32.gmra.mrb[0].mxu0 %v863
    %v865 = vpop.f32.mrb[0].mxu0
    %v866 = vadd.f32 %v691, %v865
    %v867 = vpop.f32.mrb[0].mxu0
    %868 = vmatprep.mubr.f32.mxu0 0.0
    %v869 = vand.u32 %v315, 4294901760
    %v870 = vsub.f32 %v315, %v869
    %871 = vmatmul.mubr.f32.gmra.mrb[0].mxu0 %v870
    %v872 = vpop.f32.mrb[0].mxu0
    %v873 = vadd.f32 %v697, %v872
    %v874 = vpop.f32.mrb[0].mxu0
    %875 = vmatprep.mubr.f32.mxu0 0.0
    %v876 = vand.u32 %v318, 4294901760
    %v877 = vsub.f32 %v318, %v876
    %878 = vmatmul.mubr.f32.gmra.mrb[0].mxu0 %v877
    %v879 = vpop.f32.mrb[0].mxu0
    %v880 = vadd.f32 %v703, %v879
    %v881 = vpop.f32.mrb[0].mxu0
    %882 = vmatprep.mubr.f32.mxu0 0.0
    %v883 = vand.u32 %v321, 4294901760
    %v884 = vsub.f32 %v321, %v883
    %885 = vmatmul.mubr.f32.gmra.mrb[0].mxu0 %v884
    %v886 = vpop.f32.mrb[0].mxu0
    %v887 = vadd.f32 %v709, %v886
    %v888 = vpop.f32.mrb[0].mxu0
    %889 = vmatprep.mubr.f32.mxu0 0.0
    %v890 = vand.u32 %v324, 4294901760
    %v891 = vsub.f32 %v324, %v890
    %892 = vmatmul.mubr.f32.gmra.mrb[0].mxu0 %v891
    %v893 = vpop.f32.mrb[0].mxu0
    %v894 = vadd.f32 %v715, %v893
    %v895 = vpop.f32.mrb[0].mxu0
    %896 = vmatprep.mubr.f32.mxu0 0.0
    %v897 = vand.u32 %v327, 4294901760
    %v898 = vsub.f32 %v327, %v897
    %899 = vmatmul.mubr.f32.gmra.mrb[0].mxu0 %v898
    %v900 = vpop.f32.mrb[0].mxu0
    %v901 = vadd.f32 %v721, %v900
    %v902 = vpop.f32.mrb[0].mxu0
    %903 = vmatprep.mubr.f32.mxu0 0.0
    %v904 = vand.u32 %v330, 4294901760
    %v905 = vsub.f32 %v330, %v904
    %906 = vmatmul.mubr.f32.gmra.mrb[0].mxu0 %v905
    %v907 = vpop.f32.mrb[0].mxu0
    %v908 = vadd.f32 %v727, %v907
    %v909 = vpop.f32.mrb[0].mxu0
    %910 = vmatprep.mubr.f32.mxu0 0.0
    %v911 = vand.u32 %v333, 4294901760
    %v912 = vsub.f32 %v333, %v911
    %913 = vmatmul.mubr.f32.gmra.mrb[0].mxu0 %v912
    %v914 = vpop.f32.mrb[0].mxu0
    %v915 = vadd.f32 %v733, %v914
    %v916 = vpop.f32.mrb[0].mxu0
    %917 = vmatprep.mubr.f32.mxu0 0.0
    %v918 = vand.u32 %v336, 4294901760
    %v919 = vsub.f32 %v336, %v918
    %920 = vmatmul.mubr.f32.gmra.mrb[0].mxu0 %v919
    %v921 = vpop.f32.mrb[0].mxu0
    %v922 = vadd.f32 %v739, %v921
    %v923 = vpop.f32.mrb[0].mxu0
    %924 = vmatprep.mubr.f32.mxu0 0.0
    %v925 = vand.u32 %v339, 4294901760
    %v926 = vsub.f32 %v339, %v925
    %927 = vmatmul.mubr.f32.gmra.mrb[0].mxu0 %v926
    %v928 = vpop.f32.mrb[0].mxu0
    %v929 = vadd.f32 %v745, %v928
    %v930 = vpop.f32.mrb[0].mxu0
    %931 = vmatprep.mubr.f32.mxu0 0.0
    %v932 = vand.u32 %v342, 4294901760
    %v933 = vsub.f32 %v342, %v932
    %934 = vmatmul.mubr.f32.gmra.mrb[0].mxu0 %v933
    %v935 = vpop.f32.mrb[0].mxu0
    %v936 = vadd.f32 %v751, %v935
    %v937 = vpop.f32.mrb[0].mxu0
    %938 = vdwg.mxu0
    %939 = vmatprep.subr.mxu0 0.0
    %v940 = vand.u32 %v291, 4294901760
    %941 = vmatpush1.msra.mxu0 %v940
    %942 = vmatprep.subr.mxu0 0.0
    %v943 = vand.u32 %v292, 4294901760
    %944 = vmatpush1.msra.mxu0 %v943
    %945 = vmatprep.subr.mxu0 0.0
    %v946 = vand.u32 %v293, 4294901760
    %947 = vmatpush1.msra.mxu0 %v946
    %948 = vmatprep.subr.mxu0 0.0
    %v949 = vand.u32 %v294, 4294901760
    %950 = vmatpush1.msra.mxu0 %v949
    %951 = vmatprep.subr.mxu0 0.0
    %952 = vmatpush1.msra.mxu0 0.0
    %953 = vmatprep.subr.mxu0 0.0
    %954 = vmatpush1.msra.mxu0 0.0
    %955 = vmatprep.subr.mxu0 0.0
    %956 = vmatpush1.msra.mxu0 0.0
    %957 = vmatprep.subr.mxu0 0.0
    %958 = vmatpush1.msra.mxu0 0.0
    %959 = vmatprep.subr.mxu0 0.0
    %960 = vmatpush1.msra.mxu0 0.0
    %961 = vmatprep.subr.mxu0 0.0
    %962 = vmatpush1.msra.mxu0 0.0
    %963 = vmatprep.subr.mxu0 0.0
    %964 = vmatpush1.msra.mxu0 0.0
    %965 = vmatprep.subr.mxu0 0.0
    %966 = vmatpush1.msra.mxu0 0.0
    %967 = vmatprep.subr.mxu0 0.0
    %968 = vmatpush1.msra.mxu0 0.0
    %969 = vmatprep.subr.mxu0 0.0
    %970 = vmatpush1.msra.mxu0 0.0
    %971 = vmatprep.subr.mxu0 0.0
    %972 = vmatpush1.msra.mxu0 0.0
    %973 = vmatprep.subr.mxu0 0.0
    %974 = vmatpush1.msra.mxu0 0.0
    %975 = vmatprep.subr.mxu0 0.0
    %976 = vmatpush1.msra.mxu0 0.0
    %977 = vmatprep.subr.mxu0 0.0
    %978 = vmatpush1.msra.mxu0 0.0
    %979 = vmatprep.subr.mxu0 0.0
    %980 = vmatpush1.msra.mxu0 0.0
    %981 = vmatprep.subr.mxu0 0.0
    %982 = vmatpush1.msra.mxu0 0.0
    %983 = vmatprep.subr.mxu0 0.0
    %984 = vmatpush1.msra.mxu0 0.0
    %985 = vmatprep.subr.mxu0 0.0
    %986 = vmatpush1.msra.mxu0 0.0
    %987 = vmatprep.subr.mxu0 0.0
    %988 = vmatpush1.msra.mxu0 0.0
    %989 = vmatprep.subr.mxu0 0.0
    %990 = vmatpush1.msra.mxu0 0.0
    %991 = vmatprep.subr.mxu0 0.0
    %992 = vmatpush1.msra.mxu0 0.0
    %993 = vmatprep.subr.mxu0 0.0
    %994 = vmatpush1.msra.mxu0 0.0
    %995 = vmatprep.subr.mxu0 0.0
    %996 = vmatpush1.msra.mxu0 0.0
    %997 = vmatprep.subr.mxu0 0.0
    %998 = vmatpush1.msra.mxu0 0.0
    %999 = vmatprep.subr.mxu0 0.0
    %1000 = vmatpush1.msra.mxu0 0.0
    %1001 = vmatprep.subr.mxu0 0.0
    %1002 = vmatpush1.msra.mxu0 0.0
    %1003 = vmatprep.subr.mxu0 0.0
    %1004 = vmatpush1.msra.mxu0 0.0
    %1005 = vmatprep.subr.mxu0 0.0
    %1006 = vmatpush1.msra.mxu0 0.0
    %1007 = vmatprep.mubr.f32.mxu0 0.0
    %v1008 = vand.u32 %v297, 4294901760
    %v1009 = vsub.f32 %v297, %v1008
    %v1010 = vand.u32 %v1009, 4294901760
    %1011 = vmatmul.mubr.f32.gmra.mrb[0].mxu0 %v1010
    %v1012 = vpop.f32.mrb[0].mxu0
    %v1013 = vadd.f32 %v831, %v1012
    %v1014 = vpop.f32.mrb[0].mxu0
    %1015 = vmatprep.mubr.f32.mxu0 0.0
    %v1016 = vand.u32 %v300, 4294901760
    %v1017 = vsub.f32 %v300, %v1016
    %v1018 = vand.u32 %v1017, 4294901760
    %1019 = vmatmul.mubr.f32.gmra.mrb[0].mxu0 %v1018
    %v1020 = vpop.f32.mrb[0].mxu0
    %v1021 = vadd.f32 %v838, %v1020
    %v1022 = vpop.f32.mrb[0].mxu0
    %1023 = vmatprep.mubr.f32.mxu0 0.0
    %v1024 = vand.u32 %v303, 4294901760
    %v1025 = vsub.f32 %v303, %v1024
    %v1026 = vand.u32 %v1025, 4294901760
    %1027 = vmatmul.mubr.f32.gmra.mrb[0].mxu0 %v1026
    %v1028 = vpop.f32.mrb[0].mxu0
    %v1029 = vadd.f32 %v845, %v1028
    %v1030 = vpop.f32.mrb[0].mxu0
    %1031 = vmatprep.mubr.f32.mxu0 0.0
    %v1032 = vand.u32 %v306, 4294901760
    %v1033 = vsub.f32 %v306, %v1032
    %v1034 = vand.u32 %v1033, 4294901760
    %1035 = vmatmul.mubr.f32.gmra.mrb[0].mxu0 %v1034
    %v1036 = vpop.f32.mrb[0].mxu0
    %v1037 = vadd.f32 %v852, %v1036
    %v1038 = vpop.f32.mrb[0].mxu0
    %1039 = vmatprep.mubr.f32.mxu0 0.0
    %v1040 = vand.u32 %v309, 4294901760
    %v1041 = vsub.f32 %v309, %v1040
    %v1042 = vand.u32 %v1041, 4294901760
    %1043 = vmatmul.mubr.f32.gmra.mrb[0].mxu0 %v1042
    %v1044 = vpop.f32.mrb[0].mxu0
    %v1045 = vadd.f32 %v859, %v1044
    %v1046 = vpop.f32.mrb[0].mxu0
    %1047 = vmatprep.mubr.f32.mxu0 0.0
    %v1048 = vand.u32 %v312, 4294901760
    %v1049 = vsub.f32 %v312, %v1048
    %v1050 = vand.u32 %v1049, 4294901760
    %1051 = vmatmul.mubr.f32.gmra.mrb[0].mxu0 %v1050
    %v1052 = vpop.f32.mrb[0].mxu0
    %v1053 = vadd.f32 %v866, %v1052
    %v1054 = vpop.f32.mrb[0].mxu0
    %1055 = vmatprep.mubr.f32.mxu0 0.0
    %v1056 = vand.u32 %v315, 4294901760
    %v1057 = vsub.f32 %v315, %v1056
    %v1058 = vand.u32 %v1057, 4294901760
    %1059 = vmatmul.mubr.f32.gmra.mrb[0].mxu0 %v1058
    %v1060 = vpop.f32.mrb[0].mxu0
    %v1061 = vadd.f32 %v873, %v1060
    %v1062 = vpop.f32.mrb[0].mxu0
    %1063 = vmatprep.mubr.f32.mxu0 0.0
    %v1064 = vand.u32 %v318, 4294901760
    %v1065 = vsub.f32 %v318, %v1064
    %v1066 = vand.u32 %v1065, 4294901760
    %1067 = vmatmul.mubr.f32.gmra.mrb[0].mxu0 %v1066
    %v1068 = vpop.f32.mrb[0].mxu0
    %v1069 = vadd.f32 %v880, %v1068
    %v1070 = vpop.f32.mrb[0].mxu0
    %1071 = vmatprep.mubr.f32.mxu0 0.0
    %v1072 = vand.u32 %v321, 4294901760
    %v1073 = vsub.f32 %v321, %v1072
    %v1074 = vand.u32 %v1073, 4294901760
    %1075 = vmatmul.mubr.f32.gmra.mrb[0].mxu0 %v1074
    %v1076 = vpop.f32.mrb[0].mxu0
    %v1077 = vadd.f32 %v887, %v1076
    %v1078 = vpop.f32.mrb[0].mxu0
    %1079 = vmatprep.mubr.f32.mxu0 0.0
    %v1080 = vand.u32 %v324, 4294901760
    %v1081 = vsub.f32 %v324, %v1080
    %v1082 = vand.u32 %v1081, 4294901760
    %1083 = vmatmul.mubr.f32.gmra.mrb[0].mxu0 %v1082
    %v1084 = vpop.f32.mrb[0].mxu0
    %v1085 = vadd.f32 %v894, %v1084
    %v1086 = vpop.f32.mrb[0].mxu0
    %1087 = vmatprep.mubr.f32.mxu0 0.0
    %v1088 = vand.u32 %v327, 4294901760
    %v1089 = vsub.f32 %v327, %v1088
    %v1090 = vand.u32 %v1089, 4294901760
    %1091 = vmatmul.mubr.f32.gmra.mrb[0].mxu0 %v1090
    %v1092 = vpop.f32.mrb[0].mxu0
    %v1093 = vadd.f32 %v901, %v1092
    %v1094 = vpop.f32.mrb[0].mxu0
    %1095 = vmatprep.mubr.f32.mxu0 0.0
    %v1096 = vand.u32 %v330, 4294901760
    %v1097 = vsub.f32 %v330, %v1096
    %v1098 = vand.u32 %v1097, 4294901760
    %1099 = vmatmul.mubr.f32.gmra.mrb[0].mxu0 %v1098
    %v1100 = vpop.f32.mrb[0].mxu0
    %v1101 = vadd.f32 %v908, %v1100
    %v1102 = vpop.f32.mrb[0].mxu0
    %1103 = vmatprep.mubr.f32.mxu0 0.0
    %v1104 = vand.u32 %v333, 4294901760
    %v1105 = vsub.f32 %v333, %v1104
    %v1106 = vand.u32 %v1105, 4294901760
    %1107 = vmatmul.mubr.f32.gmra.mrb[0].mxu0 %v1106
    %v1108 = vpop.f32.mrb[0].mxu0
    %v1109 = vadd.f32 %v915, %v1108
    %v1110 = vpop.f32.mrb[0].mxu0
    %1111 = vmatprep.mubr.f32.mxu0 0.0
    %v1112 = vand.u32 %v336, 4294901760
    %v1113 = vsub.f32 %v336, %v1112
    %v1114 = vand.u32 %v1113, 4294901760
    %1115 = vmatmul.mubr.f32.gmra.mrb[0].mxu0 %v1114
    %v1116 = vpop.f32.mrb[0].mxu0
    %v1117 = vadd.f32 %v922, %v1116
    %v1118 = vpop.f32.mrb[0].mxu0
    %1119 = vmatprep.mubr.f32.mxu0 0.0
    %v1120 = vand.u32 %v339, 4294901760
    %v1121 = vsub.f32 %v339, %v1120
    %v1122 = vand.u32 %v1121, 4294901760
    %1123 = vmatmul.mubr.f32.gmra.mrb[0].mxu0 %v1122
    %v1124 = vpop.f32.mrb[0].mxu0
    %v1125 = vadd.f32 %v929, %v1124
    %v1126 = vpop.f32.mrb[0].mxu0
    %1127 = vmatprep.mubr.f32.mxu0 0.0
    %v1128 = vand.u32 %v342, 4294901760
    %v1129 = vsub.f32 %v342, %v1128
    %v1130 = vand.u32 %v1129, 4294901760
    %1131 = vmatmul.mubr.f32.gmra.mrb[0].mxu0 %v1130
    %v1132 = vpop.f32.mrb[0].mxu0
    %v1133 = vadd.f32 %v936, %v1132
    %v1134 = vpop.f32.mrb[0].mxu0
    %1135 = vdwg.mxu0
    %1136 = vmatprep.subr.mxu0 0.0
    %v1137 = vand.u32 %v291, 4294901760
    %v1138 = vsub.f32 %v291, %v1137
    %v1139 = vand.u32 %v1138, 4294901760
    %1140 = vmatpush1.msra.mxu0 %v1139
    %1141 = vmatprep.subr.mxu0 0.0
    %v1142 = vand.u32 %v292, 4294901760
    %v1143 = vsub.f32 %v292, %v1142
    %v1144 = vand.u32 %v1143, 4294901760
    %1145 = vmatpush1.msra.mxu0 %v1144
    %1146 = vmatprep.subr.mxu0 0.0
    %v1147 = vand.u32 %v293, 4294901760
    %v1148 = vsub.f32 %v293, %v1147
    %v1149 = vand.u32 %v1148, 4294901760
    %1150 = vmatpush1.msra.mxu0 %v1149
    %1151 = vmatprep.subr.mxu0 0.0
    %v1152 = vand.u32 %v294, 4294901760
    %v1153 = vsub.f32 %v294, %v1152
    %v1154 = vand.u32 %v1153, 4294901760
    %1155 = vmatpush1.msra.mxu0 %v1154
    %1156 = vmatprep.subr.mxu0 0.0
    %1157 = vmatpush1.msra.mxu0 0.0
    %1158 = vmatprep.subr.mxu0 0.0
    %1159 = vmatpush1.msra.mxu0 0.0
    %1160 = vmatprep.subr.mxu0 0.0
    %1161 = vmatpush1.msra.mxu0 0.0
    %1162 = vmatprep.subr.mxu0 0.0
    %1163 = vmatpush1.msra.mxu0 0.0
    %1164 = vmatprep.subr.mxu0 0.0
    %1165 = vmatpush1.msra.mxu0 0.0
    %1166 = vmatprep.subr.mxu0 0.0
    %1167 = vmatpush1.msra.mxu0 0.0
    %1168 = vmatprep.subr.mxu0 0.0
    %1169 = vmatpush1.msra.mxu0 0.0
    %1170 = vmatprep.subr.mxu0 0.0
    %1171 = vmatpush1.msra.mxu0 0.0
    %1172 = vmatprep.subr.mxu0 0.0
    %1173 = vmatpush1.msra.mxu0 0.0
    %1174 = vmatprep.subr.mxu0 0.0
    %1175 = vmatpush1.msra.mxu0 0.0
    %1176 = vmatprep.subr.mxu0 0.0
    %1177 = vmatpush1.msra.mxu0 0.0
    %1178 = vmatprep.subr.mxu0 0.0
    %1179 = vmatpush1.msra.mxu0 0.0
    %1180 = vmatprep.subr.mxu0 0.0
    %1181 = vmatpush1.msra.mxu0 0.0
    %1182 = vmatprep.subr.mxu0 0.0
    %1183 = vmatpush1.msra.mxu0 0.0
    %1184 = vmatprep.subr.mxu0 0.0
    %1185 = vmatpush1.msra.mxu0 0.0
    %1186 = vmatprep.subr.mxu0 0.0
    %1187 = vmatpush1.msra.mxu0 0.0
    %1188 = vmatprep.subr.mxu0 0.0
    %1189 = vmatpush1.msra.mxu0 0.0
    %1190 = vmatprep.subr.mxu0 0.0
    %1191 = vmatpush1.msra.mxu0 0.0
    %1192 = vmatprep.subr.mxu0 0.0
    %1193 = vmatpush1.msra.mxu0 0.0
    %1194 = vmatprep.subr.mxu0 0.0
    %1195 = vmatpush1.msra.mxu0 0.0
    %1196 = vmatprep.subr.mxu0 0.0
    %1197 = vmatpush1.msra.mxu0 0.0
    %1198 = vmatprep.subr.mxu0 0.0
    %1199 = vmatpush1.msra.mxu0 0.0
    %1200 = vmatprep.subr.mxu0 0.0
    %1201 = vmatpush1.msra.mxu0 0.0
    %1202 = vmatprep.subr.mxu0 0.0
    %1203 = vmatpush1.msra.mxu0 0.0
    %1204 = vmatprep.subr.mxu0 0.0
    %1205 = vmatpush1.msra.mxu0 0.0
    %1206 = vmatprep.subr.mxu0 0.0
    %1207 = vmatpush1.msra.mxu0 0.0
    %1208 = vmatprep.subr.mxu0 0.0
    %1209 = vmatpush1.msra.mxu0 0.0
    %1210 = vmatprep.subr.mxu0 0.0
    %1211 = vmatpush1.msra.mxu0 0.0
    %1212 = vmatprep.mubr.f32.mxu0 0.0
    %v1213 = vand.u32 %v297, 4294901760
    %1214 = vmatmul.mubr.f32.gmra.mrb[0].mxu0 %v1213
    %v1215 = vpop.f32.mrb[0].mxu0
    %v1216 = vadd.f32 %v1013, %v1215
    %v1217 = vpop.f32.mrb[0].mxu0
    %1218 = vmatprep.mubr.f32.mxu0 0.0
    %v1219 = vand.u32 %v300, 4294901760
    %1220 = vmatmul.mubr.f32.gmra.mrb[0].mxu0 %v1219
    %v1221 = vpop.f32.mrb[0].mxu0
    %v1222 = vadd.f32 %v1021, %v1221
    %v1223 = vpop.f32.mrb[0].mxu0
    %1224 = vmatprep.mubr.f32.mxu0 0.0
    %v1225 = vand.u32 %v303, 4294901760
    %1226 = vmatmul.mubr.f32.gmra.mrb[0].mxu0 %v1225
    %v1227 = vpop.f32.mrb[0].mxu0
    %v1228 = vadd.f32 %v1029, %v1227
    %v1229 = vpop.f32.mrb[0].mxu0
    %1230 = vmatprep.mubr.f32.mxu0 0.0
    %v1231 = vand.u32 %v306, 4294901760
    %1232 = vmatmul.mubr.f32.gmra.mrb[0].mxu0 %v1231
    %v1233 = vpop.f32.mrb[0].mxu0
    %v1234 = vadd.f32 %v1037, %v1233
    %v1235 = vpop.f32.mrb[0].mxu0
    %1236 = vmatprep.mubr.f32.mxu0 0.0
    %v1237 = vand.u32 %v309, 4294901760
    %1238 = vmatmul.mubr.f32.gmra.mrb[0].mxu0 %v1237
    %v1239 = vpop.f32.mrb[0].mxu0
    %v1240 = vadd.f32 %v1045, %v1239
    %v1241 = vpop.f32.mrb[0].mxu0
    %1242 = vmatprep.mubr.f32.mxu0 0.0
    %v1243 = vand.u32 %v312, 4294901760
    %1244 = vmatmul.mubr.f32.gmra.mrb[0].mxu0 %v1243
    %v1245 = vpop.f32.mrb[0].mxu0
    %v1246 = vadd.f32 %v1053, %v1245
    %v1247 = vpop.f32.mrb[0].mxu0
    %1248 = vmatprep.mubr.f32.mxu0 0.0
    %v1249 = vand.u32 %v315, 4294901760
    %1250 = vmatmul.mubr.f32.gmra.mrb[0].mxu0 %v1249
    %v1251 = vpop.f32.mrb[0].mxu0
    %v1252 = vadd.f32 %v1061, %v1251
    %v1253 = vpop.f32.mrb[0].mxu0
    %1254 = vmatprep.mubr.f32.mxu0 0.0
    %v1255 = vand.u32 %v318, 4294901760
    %1256 = vmatmul.mubr.f32.gmra.mrb[0].mxu0 %v1255
    %v1257 = vpop.f32.mrb[0].mxu0
    %v1258 = vadd.f32 %v1069, %v1257
    %v1259 = vpop.f32.mrb[0].mxu0
    %1260 = vmatprep.mubr.f32.mxu0 0.0
    %v1261 = vand.u32 %v321, 4294901760
    %1262 = vmatmul.mubr.f32.gmra.mrb[0].mxu0 %v1261
    %v1263 = vpop.f32.mrb[0].mxu0
    %v1264 = vadd.f32 %v1077, %v1263
    %v1265 = vpop.f32.mrb[0].mxu0
    %1266 = vmatprep.mubr.f32.mxu0 0.0
    %v1267 = vand.u32 %v324, 4294901760
    %1268 = vmatmul.mubr.f32.gmra.mrb[0].mxu0 %v1267
    %v1269 = vpop.f32.mrb[0].mxu0
    %v1270 = vadd.f32 %v1085, %v1269
    %v1271 = vpop.f32.mrb[0].mxu0
    %1272 = vmatprep.mubr.f32.mxu0 0.0
    %v1273 = vand.u32 %v327, 4294901760
    %1274 = vmatmul.mubr.f32.gmra.mrb[0].mxu0 %v1273
    %v1275 = vpop.f32.mrb[0].mxu0
    %v1276 = vadd.f32 %v1093, %v1275
    %v1277 = vpop.f32.mrb[0].mxu0
    %1278 = vmatprep.mubr.f32.mxu0 0.0
    %v1279 = vand.u32 %v330, 4294901760
    %1280 = vmatmul.mubr.f32.gmra.mrb[0].mxu0 %v1279
    %v1281 = vpop.f32.mrb[0].mxu0
    %v1282 = vadd.f32 %v1101, %v1281
    %v1283 = vpop.f32.mrb[0].mxu0
    %1284 = vmatprep.mubr.f32.mxu0 0.0
    %v1285 = vand.u32 %v333, 4294901760
    %1286 = vmatmul.mubr.f32.gmra.mrb[0].mxu0 %v1285
    %v1287 = vpop.f32.mrb[0].mxu0
    %v1288 = vadd.f32 %v1109, %v1287
    %v1289 = vpop.f32.mrb[0].mxu0
    %1290 = vmatprep.mubr.f32.mxu0 0.0
    %v1291 = vand.u32 %v336, 4294901760
    %1292 = vmatmul.mubr.f32.gmra.mrb[0].mxu0 %v1291
    %v1293 = vpop.f32.mrb[0].mxu0
    %v1294 = vadd.f32 %v1117, %v1293
    %v1295 = vpop.f32.mrb[0].mxu0
    %1296 = vmatprep.mubr.f32.mxu0 0.0
    %v1297 = vand.u32 %v339, 4294901760
    %1298 = vmatmul.mubr.f32.gmra.mrb[0].mxu0 %v1297
    %v1299 = vpop.f32.mrb[0].mxu0
    %v1300 = vadd.f32 %v1125, %v1299
    %v1301 = vpop.f32.mrb[0].mxu0
    %1302 = vmatprep.mubr.f32.mxu0 0.0
    %v1303 = vand.u32 %v342, 4294901760
    %1304 = vmatmul.mubr.f32.gmra.mrb[0].mxu0 %v1303
    %v1305 = vpop.f32.mrb[0].mxu0
    %v1306 = vadd.f32 %v1133, %v1305
    %v1307 = vpop.f32.mrb[0].mxu0
    %1308 = vdwg.mxu0
    %1309 = vmatprep.subr.mxu0 0.0
    %v1310 = vand.u32 %v291, 4294901760
    %1311 = vmatpush1.msra.mxu0 %v1310
    %1312 = vmatprep.subr.mxu0 0.0
    %v1313 = vand.u32 %v292, 4294901760
    %1314 = vmatpush1.msra.mxu0 %v1313
    %1315 = vmatprep.subr.mxu0 0.0
    %v1316 = vand.u32 %v293, 4294901760
    %1317 = vmatpush1.msra.mxu0 %v1316
    %1318 = vmatprep.subr.mxu0 0.0
    %v1319 = vand.u32 %v294, 4294901760
    %1320 = vmatpush1.msra.mxu0 %v1319
    %1321 = vmatprep.subr.mxu0 0.0
    %1322 = vmatpush1.msra.mxu0 0.0
    %1323 = vmatprep.subr.mxu0 0.0
    %1324 = vmatpush1.msra.mxu0 0.0
    %1325 = vmatprep.subr.mxu0 0.0
    %1326 = vmatpush1.msra.mxu0 0.0
    %1327 = vmatprep.subr.mxu0 0.0
    %1328 = vmatpush1.msra.mxu0 0.0
    %1329 = vmatprep.subr.mxu0 0.0
    %1330 = vmatpush1.msra.mxu0 0.0
    %1331 = vmatprep.subr.mxu0 0.0
    %1332 = vmatpush1.msra.mxu0 0.0
    %1333 = vmatprep.subr.mxu0 0.0
    %1334 = vmatpush1.msra.mxu0 0.0
    %1335 = vmatprep.subr.mxu0 0.0
    %1336 = vmatpush1.msra.mxu0 0.0
    %1337 = vmatprep.subr.mxu0 0.0
    %1338 = vmatpush1.msra.mxu0 0.0
    %1339 = vmatprep.subr.mxu0 0.0
    %1340 = vmatpush1.msra.mxu0 0.0
    %1341 = vmatprep.subr.mxu0 0.0
    %1342 = vmatpush1.msra.mxu0 0.0
    %1343 = vmatprep.subr.mxu0 0.0
    %1344 = vmatpush1.msra.mxu0 0.0
    %1345 = vmatprep.subr.mxu0 0.0
    %1346 = vmatpush1.msra.mxu0 0.0
    %1347 = vmatprep.subr.mxu0 0.0
    %1348 = vmatpush1.msra.mxu0 0.0
    %1349 = vmatprep.subr.mxu0 0.0
    %1350 = vmatpush1.msra.mxu0 0.0
    %1351 = vmatprep.subr.mxu0 0.0
    %1352 = vmatpush1.msra.mxu0 0.0
    %1353 = vmatprep.subr.mxu0 0.0
    %1354 = vmatpush1.msra.mxu0 0.0
    %1355 = vmatprep.subr.mxu0 0.0
    %1356 = vmatpush1.msra.mxu0 0.0
    %1357 = vmatprep.subr.mxu0 0.0
    %1358 = vmatpush1.msra.mxu0 0.0
    %1359 = vmatprep.subr.mxu0 0.0
    %1360 = vmatpush1.msra.mxu0 0.0
    %1361 = vmatprep.subr.mxu0 0.0
    %1362 = vmatpush1.msra.mxu0 0.0
    %1363 = vmatprep.subr.mxu0 0.0
    %1364 = vmatpush1.msra.mxu0 0.0
    %1365 = vmatprep.subr.mxu0 0.0
    %1366 = vmatpush1.msra.mxu0 0.0
    %1367 = vmatprep.subr.mxu0 0.0
    %1368 = vmatpush1.msra.mxu0 0.0
    %1369 = vmatprep.subr.mxu0 0.0
    %1370 = vmatpush1.msra.mxu0 0.0
    %1371 = vmatprep.subr.mxu0 0.0
    %1372 = vmatpush1.msra.mxu0 0.0
    %1373 = vmatprep.subr.mxu0 0.0
    %1374 = vmatpush1.msra.mxu0 0.0
    %1375 = vmatprep.subr.mxu0 0.0
    %1376 = vmatpush1.msra.mxu0 0.0
    %1377 = vmatprep.mubr.f32.mxu0 0.0
    %v1378 = vand.u32 %v297, 4294901760
    %1379 = vmatmul.mubr.f32.gmra.mrb[0].mxu0 %v1378
    %v1380 = vpop.f32.mrb[0].mxu0
    %v1381 = vadd.f32 %v1216, %v1380
    %v1382 = vpop.f32.mrb[0].mxu0
    %1383 = vmatprep.mubr.f32.mxu0 0.0
    %v1384 = vand.u32 %v300, 4294901760
    %1385 = vmatmul.mubr.f32.gmra.mrb[0].mxu0 %v1384
    %v1386 = vpop.f32.mrb[0].mxu0
    %v1387 = vadd.f32 %v1222, %v1386
    %v1388 = vpop.f32.mrb[0].mxu0
    %1389 = vmatprep.mubr.f32.mxu0 0.0
    %v1390 = vand.u32 %v303, 4294901760
    %1391 = vmatmul.mubr.f32.gmra.mrb[0].mxu0 %v1390
    %v1392 = vpop.f32.mrb[0].mxu0
    %v1393 = vadd.f32 %v1228, %v1392
    %v1394 = vpop.f32.mrb[0].mxu0
    %1395 = vmatprep.mubr.f32.mxu0 0.0
    %v1396 = vand.u32 %v306, 4294901760
    %1397 = vmatmul.mubr.f32.gmra.mrb[0].mxu0 %v1396
    %v1398 = vpop.f32.mrb[0].mxu0
    %v1399 = vadd.f32 %v1234, %v1398
    %v1400 = vpop.f32.mrb[0].mxu0
    %1401 = vmatprep.mubr.f32.mxu0 0.0
    %v1402 = vand.u32 %v309, 4294901760
    %1403 = vmatmul.mubr.f32.gmra.mrb[0].mxu0 %v1402
    %v1404 = vpop.f32.mrb[0].mxu0
    %v1405 = vadd.f32 %v1240, %v1404
    %v1406 = vpop.f32.mrb[0].mxu0
    %1407 = vmatprep.mubr.f32.mxu0 0.0
    %v1408 = vand.u32 %v312, 4294901760
    %1409 = vmatmul.mubr.f32.gmra.mrb[0].mxu0 %v1408
    %v1410 = vpop.f32.mrb[0].mxu0
    %v1411 = vadd.f32 %v1246, %v1410
    %v1412 = vpop.f32.mrb[0].mxu0
    %1413 = vmatprep.mubr.f32.mxu0 0.0
    %v1414 = vand.u32 %v315, 4294901760
    %1415 = vmatmul.mubr.f32.gmra.mrb[0].mxu0 %v1414
    %v1416 = vpop.f32.mrb[0].mxu0
    %v1417 = vadd.f32 %v1252, %v1416
    %v1418 = vpop.f32.mrb[0].mxu0
    %1419 = vmatprep.mubr.f32.mxu0 0.0
    %v1420 = vand.u32 %v318, 4294901760
    %1421 = vmatmul.mubr.f32.gmra.mrb[0].mxu0 %v1420
    %v1422 = vpop.f32.mrb[0].mxu0
    %v1423 = vadd.f32 %v1258, %v1422
    %v1424 = vpop.f32.mrb[0].mxu0
    %1425 = vmatprep.mubr.f32.mxu0 0.0
    %v1426 = vand.u32 %v321, 4294901760
    %1427 = vmatmul.mubr.f32.gmra.mrb[0].mxu0 %v1426
    %v1428 = vpop.f32.mrb[0].mxu0
    %v1429 = vadd.f32 %v1264, %v1428
    %v1430 = vpop.f32.mrb[0].mxu0
    %1431 = vmatprep.mubr.f32.mxu0 0.0
    %v1432 = vand.u32 %v324, 4294901760
    %1433 = vmatmul.mubr.f32.gmra.mrb[0].mxu0 %v1432
    %v1434 = vpop.f32.mrb[0].mxu0
    %v1435 = vadd.f32 %v1270, %v1434
    %v1436 = vpop.f32.mrb[0].mxu0
    %1437 = vmatprep.mubr.f32.mxu0 0.0
    %v1438 = vand.u32 %v327, 4294901760
    %1439 = vmatmul.mubr.f32.gmra.mrb[0].mxu0 %v1438
    %v1440 = vpop.f32.mrb[0].mxu0
    %v1441 = vadd.f32 %v1276, %v1440
    %v1442 = vpop.f32.mrb[0].mxu0
    %1443 = vmatprep.mubr.f32.mxu0 0.0
    %v1444 = vand.u32 %v330, 4294901760
    %1445 = vmatmul.mubr.f32.gmra.mrb[0].mxu0 %v1444
    %v1446 = vpop.f32.mrb[0].mxu0
    %v1447 = vadd.f32 %v1282, %v1446
    %v1448 = vpop.f32.mrb[0].mxu0
    %1449 = vmatprep.mubr.f32.mxu0 0.0
    %v1450 = vand.u32 %v333, 4294901760
    %1451 = vmatmul.mubr.f32.gmra.mrb[0].mxu0 %v1450
    %v1452 = vpop.f32.mrb[0].mxu0
    %v1453 = vadd.f32 %v1288, %v1452
    %v1454 = vpop.f32.mrb[0].mxu0
    %1455 = vmatprep.mubr.f32.mxu0 0.0
    %v1456 = vand.u32 %v336, 4294901760
    %1457 = vmatmul.mubr.f32.gmra.mrb[0].mxu0 %v1456
    %v1458 = vpop.f32.mrb[0].mxu0
    %v1459 = vadd.f32 %v1294, %v1458
    %v1460 = vpop.f32.mrb[0].mxu0
    %1461 = vmatprep.mubr.f32.mxu0 0.0
    %v1462 = vand.u32 %v339, 4294901760
    %1463 = vmatmul.mubr.f32.gmra.mrb[0].mxu0 %v1462
    %v1464 = vpop.f32.mrb[0].mxu0
    %v1465 = vadd.f32 %v1300, %v1464
    %v1466 = vpop.f32.mrb[0].mxu0
    %1467 = vmatprep.mubr.f32.mxu0 0.0
    %v1468 = vand.u32 %v342, 4294901760
    %1469 = vmatmul.mubr.f32.gmra.mrb[0].mxu0 %v1468
    %v1470 = vpop.f32.mrb[0].mxu0
    %v1471 = vadd.f32 %v1306, %v1470
    %v1472 = vpop.f32.mrb[0].mxu0
    %1473 = vdwg.mxu0
    %v1474 = vmul.f32 %v1381, %v1381
    %v1475 = vmul.f32 %v1387, %v1387
    %v1476 = vmul.f32 %v1393, %v1393
    %v1477 = vmul.f32 %v1399, %v1399
    %v1478 = vmul.f32 %v1405, %v1405
    %v1479 = vmul.f32 %v1411, %v1411
    %v1480 = vmul.f32 %v1417, %v1417
    %v1481 = vmul.f32 %v1423, %v1423
    %v1482 = vmul.f32 %v1429, %v1429
    %v1483 = vmul.f32 %v1435, %v1435
    %v1484 = vmul.f32 %v1441, %v1441
    %v1485 = vmul.f32 %v1447, %v1447
    %v1486 = vmul.f32 %v1453, %v1453
    %v1487 = vmul.f32 %v1459, %v1459
    %v1488 = vmul.f32 %v1465, %v1465
    %v1489 = vmul.f32 %v1471, %v1471
    %1490 = vadd.xlane.f32.xlu0 %v1474
    %v1491 = vpop.xlane.xlu0 %1490
    %1492 = vadd.xlane.f32.xlu0 %v1475
    %v1493 = vpop.xlane.xlu0 %1492
    %1494 = vadd.xlane.f32.xlu0 %v1476
    %v1495 = vpop.xlane.xlu0 %1494
    %1496 = vadd.xlane.f32.xlu0 %v1477
    %v1497 = vpop.xlane.xlu0 %1496
    %1498 = vadd.xlane.f32.xlu0 %v1478
    %v1499 = vpop.xlane.xlu0 %1498
    %1500 = vadd.xlane.f32.xlu0 %v1479
    %v1501 = vpop.xlane.xlu0 %1500
    %1502 = vadd.xlane.f32.xlu0 %v1480
    %v1503 = vpop.xlane.xlu0 %1502
    %1504 = vadd.xlane.f32.xlu0 %v1481
    %v1505 = vpop.xlane.xlu0 %1504
    %1506 = vadd.xlane.f32.xlu0 %v1482
    %v1507 = vpop.xlane.xlu0 %1506
    %1508 = vadd.xlane.f32.xlu0 %v1483
    %v1509 = vpop.xlane.xlu0 %1508
    %1510 = vadd.xlane.f32.xlu0 %v1484
    %v1511 = vpop.xlane.xlu0 %1510
    %1512 = vadd.xlane.f32.xlu0 %v1485
    %v1513 = vpop.xlane.xlu0 %1512
    %1514 = vadd.xlane.f32.xlu0 %v1486
    %v1515 = vpop.xlane.xlu0 %1514
    %1516 = vadd.xlane.f32.xlu0 %v1487
    %v1517 = vpop.xlane.xlu0 %1516
    %1518 = vadd.xlane.f32.xlu0 %v1488
    %v1519 = vpop.xlane.xlu0 %1518
    %1520 = vadd.xlane.f32.xlu0 %v1489
    %v1521 = vpop.xlane.xlu0 %1520
    %vm1522 = vcmp.eq.s32.totalorder %v65, 1
    %vm1523 = vcmp.eq.s32.totalorder %v66, 1
    %vm1524 = vcmp.eq.s32.totalorder %v67, 1
    %vm1525 = vcmp.eq.s32.totalorder %v68, 1
    %vm1526 = vcmp.eq.s32.totalorder %v69, 1
    %vm1527 = vcmp.eq.s32.totalorder %v70, 1
    %vm1528 = vcmp.eq.s32.totalorder %v71, 1
    %vm1529 = vcmp.eq.s32.totalorder %v72, 1
    %vm1530 = vcmp.eq.s32.totalorder %v73, 1
    %vm1531 = vcmp.eq.s32.totalorder %v74, 1
    %vm1532 = vcmp.eq.s32.totalorder %v75, 1
    %vm1533 = vcmp.eq.s32.totalorder %v76, 1
    %vm1534 = vcmp.eq.s32.totalorder %v77, 1
    %vm1535 = vcmp.eq.s32.totalorder %v78, 1
    %vm1536 = vcmp.eq.s32.totalorder %v79, 1
    %vm1537 = vcmp.eq.s32.totalorder %v80, 1
    %v1538 = vstv %s32
    %vm1539 = vcmp.gt.f32.partialorder %v1491, %v1538
    %vm1540 = vcmp.gt.f32.partialorder %v1493, %v1538
    %vm1541 = vcmp.gt.f32.partialorder %v1495, %v1538
    %vm1542 = vcmp.gt.f32.partialorder %v1497, %v1538
    %vm1543 = vcmp.gt.f32.partialorder %v1499, %v1538
    %vm1544 = vcmp.gt.f32.partialorder %v1501, %v1538
    %vm1545 = vcmp.gt.f32.partialorder %v1503, %v1538
    %vm1546 = vcmp.gt.f32.partialorder %v1505, %v1538
    %vm1547 = vcmp.gt.f32.partialorder %v1507, %v1538
    %vm1548 = vcmp.gt.f32.partialorder %v1509, %v1538
    %vm1549 = vcmp.gt.f32.partialorder %v1511, %v1538
    %vm1550 = vcmp.gt.f32.partialorder %v1513, %v1538
    %vm1551 = vcmp.gt.f32.partialorder %v1515, %v1538
    %vm1552 = vcmp.gt.f32.partialorder %v1517, %v1538
    %vm1553 = vcmp.gt.f32.partialorder %v1519, %v1538
    %vm1554 = vcmp.gt.f32.partialorder %v1521, %v1538
    %vm1555 = vmand %vm1522, %vm1539
    %vm1556 = vmand %vm1523, %vm1540
    %vm1557 = vmand %vm1524, %vm1541
    %vm1558 = vmand %vm1525, %vm1542
    %vm1559 = vmand %vm1526, %vm1543
    %vm1560 = vmand %vm1527, %vm1544
    %vm1561 = vmand %vm1528, %vm1545
    %vm1562 = vmand %vm1529, %vm1546
    %vm1563 = vmand %vm1530, %vm1547
    %vm1564 = vmand %vm1531, %vm1548
    %vm1565 = vmand %vm1532, %vm1549
    %vm1566 = vmand %vm1533, %vm1550
    %vm1567 = vmand %vm1534, %vm1551
    %vm1568 = vmand %vm1535, %vm1552
    %vm1569 = vmand %vm1536, %vm1553
    %vm1570 = vmand %vm1537, %vm1554
    %vm1571 = vcmp.eq.s32.totalorder %v65, 2
    %vm1572 = vcmp.eq.s32.totalorder %v66, 2
    %vm1573 = vcmp.eq.s32.totalorder %v67, 2
    %vm1574 = vcmp.eq.s32.totalorder %v68, 2
    %vm1575 = vcmp.eq.s32.totalorder %v69, 2
    %vm1576 = vcmp.eq.s32.totalorder %v70, 2
    %vm1577 = vcmp.eq.s32.totalorder %v71, 2
    %vm1578 = vcmp.eq.s32.totalorder %v72, 2
    %vm1579 = vcmp.eq.s32.totalorder %v73, 2
    %vm1580 = vcmp.eq.s32.totalorder %v74, 2
    %vm1581 = vcmp.eq.s32.totalorder %v75, 2
    %vm1582 = vcmp.eq.s32.totalorder %v76, 2
    %vm1583 = vcmp.eq.s32.totalorder %v77, 2
    %vm1584 = vcmp.eq.s32.totalorder %v78, 2
    %vm1585 = vcmp.eq.s32.totalorder %v79, 2
    %vm1586 = vcmp.eq.s32.totalorder %v80, 2
    %vm1587 = vcmp.lt.f32.partialorder %v1491, %v1538
    %vm1588 = vcmp.lt.f32.partialorder %v1493, %v1538
    %vm1589 = vcmp.lt.f32.partialorder %v1495, %v1538
    %vm1590 = vcmp.lt.f32.partialorder %v1497, %v1538
    %vm1591 = vcmp.lt.f32.partialorder %v1499, %v1538
    %vm1592 = vcmp.lt.f32.partialorder %v1501, %v1538
    %vm1593 = vcmp.lt.f32.partialorder %v1503, %v1538
    %vm1594 = vcmp.lt.f32.partialorder %v1505, %v1538
    %vm1595 = vcmp.lt.f32.partialorder %v1507, %v1538
    %vm1596 = vcmp.lt.f32.partialorder %v1509, %v1538
    %vm1597 = vcmp.lt.f32.partialorder %v1511, %v1538
    %vm1598 = vcmp.lt.f32.partialorder %v1513, %v1538
    %vm1599 = vcmp.lt.f32.partialorder %v1515, %v1538
    %vm1600 = vcmp.lt.f32.partialorder %v1517, %v1538
    %vm1601 = vcmp.lt.f32.partialorder %v1519, %v1538
    %vm1602 = vcmp.lt.f32.partialorder %v1521, %v1538
    %vm1603 = vmand %vm1571, %vm1587
    %vm1604 = vmand %vm1572, %vm1588
    %vm1605 = vmand %vm1573, %vm1589
    %vm1606 = vmand %vm1574, %vm1590
    %vm1607 = vmand %vm1575, %vm1591
    %vm1608 = vmand %vm1576, %vm1592
    %vm1609 = vmand %vm1577, %vm1593
    %vm1610 = vmand %vm1578, %vm1594
    %vm1611 = vmand %vm1579, %vm1595
    %vm1612 = vmand %vm1580, %vm1596
    %vm1613 = vmand %vm1581, %vm1597
    %vm1614 = vmand %vm1582, %vm1598
    %vm1615 = vmand %vm1583, %vm1599
    %vm1616 = vmand %vm1584, %vm1600
    %vm1617 = vmand %vm1585, %vm1601
    %vm1618 = vmand %vm1586, %vm1602
    %v1619 = vld [vmem:[#allocation3] sm:$0x1]
    %v1620 = vsel %vm1555, 1, 0
    %v1621 = vsel %vm1556, 1, 0
    %v1622 = vsel %vm1557, 1, 0
    %v1623 = vsel %vm1558, 1, 0
    %v1624 = vsel %vm1559, 1, 0
    %v1625 = vsel %vm1560, 1, 0
    %v1626 = vsel %vm1561, 1, 0
    %v1627 = vsel %vm1562, 1, 0
    %v1628 = vsel %vm1563, 1, 0
    %v1629 = vsel %vm1564, 1, 0
    %v1630 = vsel %vm1565, 1, 0
    %v1631 = vsel %vm1566, 1, 0
    %v1632 = vsel %vm1567, 1, 0
    %v1633 = vsel %vm1568, 1, 0
    %v1634 = vsel %vm1569, 1, 0
    %v1635 = vsel %vm1570, 1, 0
    %vm1636 = vcmask 7168
    %v1637 = vsel %vm1636, %v1620, 0
    %v1638 = vsel %vm1636, %v1621, 0
    %v1639 = vsel %vm1636, %v1622, 0
    %v1640 = vsel %vm1636, %v1623, 0
    %v1641 = vsel %vm1636, %v1624, 0
    %v1642 = vadd.s32 %v1637, %v1641
    %v1643 = vsel %vm1636, %v1625, 0
    %v1644 = vadd.s32 %v1638, %v1643
    %v1645 = vsel %vm1636, %v1626, 0
    %v1646 = vadd.s32 %v1639, %v1645
    %v1647 = vsel %vm1636, %v1627, 0
    %v1648 = vadd.s32 %v1640, %v1647
    %v1649 = vsel %vm1636, %v1628, 0
    %v1650 = vadd.s32 %v1642, %v1649
    %v1651 = vsel %vm1636, %v1629, 0
    %v1652 = vadd.s32 %v1644, %v1651
    %v1653 = vsel %vm1636, %v1630, 0
    %v1654 = vadd.s32 %v1646, %v1653
    %v1655 = vsel %vm1636, %v1631, 0
    %v1656 = vadd.s32 %v1648, %v1655
    %v1657 = vsel %vm1636, %v1632, 0
    %v1658 = vadd.s32 %v1650, %v1657
    %v1659 = vsel %vm1636, %v1633, 0
    %v1660 = vadd.s32 %v1652, %v1659
    %v1661 = vsel %vm1636, %v1634, 0
    %v1662 = vadd.s32 %v1654, %v1661
    %v1663 = vsel %vm1636, %v1635, 0
    %v1664 = vadd.s32 %v1656, %v1663
    %v1665 = vadd.s32 %v1658, %v1660
    %v1666 = vadd.s32 %v1662, %v1664
    %v1667 = vadd.s32 %v1665, %v1666
    %v1668 = vand.u32 %v1667, 65535
    %v1669 = vshrl.u32 %v1667, 16
    %v1670 = vcvt.s32.f32 %v1668
    %v1671 = vcvt.s32.f32 %v1669
    %1672 = vadd.xlane.f32.xlu0 %v1670
    %v1673 = vpop.xlane.xlu0 %1672
    %1674 = vadd.xlane.f32.xlu0 %v1671
    %v1675 = vpop.xlane.xlu0 %1674
    %v1676 = vcvt.f32.s32 %v1673
    %v1677 = vcvt.f32.s32 %v1675
    %v1678 = vshll.u32 %v1677, 16
    %v1679 = vadd.s32 %v1678, %v1676
    %v1680 = vrot.slane %v1679, 4
    %v1681 = vadd.s32 %v1679, %v1680
    %v1682 = vrot.slane %v1681, 2
    %v1683 = vadd.s32 %v1681, %v1682
    %v1684 = vrot.slane %v1683, 1
    %v1685 = vadd.s32 %v1683, %v1684
    %s1686 = vtos %v1685
    %v1687 = vstv %s1686
    %v1688 = vadd.s32 %v1619, %v1687
    %vm1689 = vcmask 0
    %1690 = vst.msk [vmem:[#allocation3] sm:$0x1] %vm1689, %v1688
    %v1691 = vld [vmem:[#allocation5] sm:$0x1]
    %v1692 = vsel %vm1603, 1, 0
    %v1693 = vsel %vm1604, 1, 0
    %v1694 = vsel %vm1605, 1, 0
    %v1695 = vsel %vm1606, 1, 0
    %v1696 = vsel %vm1607, 1, 0
    %v1697 = vsel %vm1608, 1, 0
    %v1698 = vsel %vm1609, 1, 0
    %v1699 = vsel %vm1610, 1, 0
    %v1700 = vsel %vm1611, 1, 0
    %v1701 = vsel %vm1612, 1, 0
    %v1702 = vsel %vm1613, 1, 0
    %v1703 = vsel %vm1614, 1, 0
    %v1704 = vsel %vm1615, 1, 0
    %v1705 = vsel %vm1616, 1, 0
    %v1706 = vsel %vm1617, 1, 0
    %v1707 = vsel %vm1618, 1, 0
    %v1708 = vsel %vm1636, %v1692, 0
    %v1709 = vsel %vm1636, %v1693, 0
    %v1710 = vsel %vm1636, %v1694, 0
    %v1711 = vsel %vm1636, %v1695, 0
    %v1712 = vsel %vm1636, %v1696, 0
    %v1713 = vadd.s32 %v1708, %v1712
    %v1714 = vsel %vm1636, %v1697, 0
    %v1715 = vadd.s32 %v1709, %v1714
    %v1716 = vsel %vm1636, %v1698, 0
    %v1717 = vadd.s32 %v1710, %v1716
    %v1718 = vsel %vm1636, %v1699, 0
    %v1719 = vadd.s32 %v1711, %v1718
    %v1720 = vsel %vm1636, %v1700, 0
    %v1721 = vadd.s32 %v1713, %v1720
    %v1722 = vsel %vm1636, %v1701, 0
    %v1723 = vadd.s32 %v1715, %v1722
    %v1724 = vsel %vm1636, %v1702, 0
    %v1725 = vadd.s32 %v1717, %v1724
    %v1726 = vsel %vm1636, %v1703, 0
    %v1727 = vadd.s32 %v1719, %v1726
    %v1728 = vsel %vm1636, %v1704, 0
    %v1729 = vadd.s32 %v1721, %v1728
    %v1730 = vsel %vm1636, %v1705, 0
    %v1731 = vadd.s32 %v1723, %v1730
    %v1732 = vsel %vm1636, %v1706, 0
    %v1733 = vadd.s32 %v1725, %v1732
    %v1734 = vsel %vm1636, %v1707, 0
    %v1735 = vadd.s32 %v1727, %v1734
    %v1736 = vadd.s32 %v1729, %v1731
    %v1737 = vadd.s32 %v1733, %v1735
    %v1738 = vadd.s32 %v1736, %v1737
    %v1739 = vand.u32 %v1738, 65535
    %v1740 = vshrl.u32 %v1738, 16
    %v1741 = vcvt.s32.f32 %v1739
    %v1742 = vcvt.s32.f32 %v1740
    %1743 = vadd.xlane.f32.xlu0 %v1741
    %v1744 = vpop.xlane.xlu0 %1743
    %1745 = vadd.xlane.f32.xlu0 %v1742
    %v1746 = vpop.xlane.xlu0 %1745
    %v1747 = vcvt.f32.s32 %v1744
    %v1748 = vcvt.f32.s32 %v1746
    %v1749 = vshll.u32 %v1748, 16
    %v1750 = vadd.s32 %v1749, %v1747
    %v1751 = vrot.slane %v1750, 4
    %v1752 = vadd.s32 %v1750, %v1751
    %v1753 = vrot.slane %v1752, 2
    %v1754 = vadd.s32 %v1752, %v1753
    %v1755 = vrot.slane %v1754, 1
    %v1756 = vadd.s32 %v1754, %v1755
    %s1757 = vtos %v1756
    %v1758 = vstv %s1757
    %v1759 = vadd.s32 %v1691, %v1758
    %1760 = vst.msk [vmem:[#allocation5] sm:$0x1] %vm1689, %v1759
    // Predicated region
    $region26: #{tpu_custom_call.1} parent=1 // pred_check
      _
    $region27: #{tpu_custom_call.1} parent=1 // pred_check_branch
      %1762 = sbr.rel (0) target = $region29
    $region28: #{tpu_custom_call.1} parent=1 // pred_region
      %s1764 = ssub.s32 16, 16
      %1765 = vsyncadd [#allocation4], %s1764
      %s1767 = sshll.u32 [#allocation3], 4
      %s1768 = int_to_ptr.vmem [resolvable:$true] %s1767
      %1770 = dma.vmem_to_hbm [thread:$0]  %s1768, 16, %s5, [#allocation4]
    $region29: #{tpu_custom_call.1} parent=1 // pred_fallthru
      _
    // Predicated region
    $region30: #{tpu_custom_call.1} parent=1 // pred_check
      _
    $region31: #{tpu_custom_call.1} parent=1 // pred_check_branch
      %1772 = sbr.rel (0) target = $region33
    $region32: #{tpu_custom_call.1} parent=1 // pred_region
      %s1774 = ssub.s32 16, 16
      %1775 = vsyncadd [#allocation6], %s1774
      %s1777 = sshll.u32 [#allocation5], 4
      %s1778 = int_to_ptr.vmem [resolvable:$true] %s1777
      %1780 = dma.vmem_to_hbm [thread:$0]  %s1778, 16, %s6, [#allocation6]
    $region33: #{tpu_custom_call.1} parent=1 // pred_fallthru
      _
    // Predicated region
    $region34: #{tpu_custom_call.1} parent=1 // pred_check
      _
    $region35: #{tpu_custom_call.1} parent=1 // pred_check_branch
      %1782 = sbr.rel (0) target = $region37
    $region36: #{tpu_custom_call.1} parent=1 // pred_region
      %1783 = dma.done [#allocation4], 16
    $region37: #{tpu_custom_call.1} parent=1 // pred_fallthru
      _
    // Predicated region
    $region38: #{tpu_custom_call.1} parent=1 // pred_check
      _
    $region39: #{tpu_custom_call.1} parent=1 // pred_check_branch
      %1785 = sbr.rel (0) target = $region41
    $region40: #{tpu_custom_call.1} parent=1 // pred_region
      %1786 = dma.done [#allocation6], 16
    $region41: #{tpu_custom_call.1} parent=1 // pred_fallthru
      _
    %1787 = vsyncpa [#allocation4], 1
    %1788 = vsyncpa [#allocation6], 1

</llo_original>
